<compile_context>
chip_gen: v7x
topology: tpu7x:2x2x1
jax: 0.10.0
libtpu: 0.0.40
codegen_flags: <defaults>
</compile_context>

<pallas_src>
import functools

import jax
import jax.numpy as jnp
from jax.experimental import pallas as pl
from jax.experimental.pallas import tpu as pltpu


def _dilated_conv_bn_relu_kernel(x_ref, w_ref, scale_ref, shift_ref, o_ref,
                                 xpad_ref, *, dilation):
    # x_ref:     (1, Cin, H, W)      one batch element, NCHW
    # w_ref:     (Cout, 9*Cin)       weights, tap-major / channel-minor rows
    # scale_ref: (Cout, 1)           folded BN scale  (gamma / sqrt(var + eps))
    # shift_ref: (Cout, 1)           folded BN shift  (beta - mean * scale)
    # o_ref:     (1, Cout, H*W)      lane-dense output (lanes carry H*W)
    # xpad_ref:  (Cin, H+2d, W+2d)   VMEM scratch with a zero halo of width d
    d = dilation
    Cin = x_ref.shape[1]
    H = x_ref.shape[2]
    W = x_ref.shape[3]
    HW = H * W

    # In-kernel halo handling (replaces a wrapper-side jnp.pad HBM round trip):
    # zero the scratch, then drop the tile into its interior.
    xpad_ref[...] = jnp.zeros_like(xpad_ref)
    xpad_ref[:, d:d + H, d:d + W] = x_ref[0]

    # im2col: stack the nine dilated taps along the contraction axis -> (9*Cin, H*W).
    taps = []
    for kh in range(3):
        for kw in range(3):
            win = xpad_ref[:, kh * d:kh * d + H, kw * d:kw * d + W]   # (Cin, H, W)
            taps.append(win.reshape(Cin, HW))
    patches = jnp.concatenate(taps, axis=0)                           # (9*Cin, H*W)

    # Single MXU contraction with K = 9*Cin, f32 accumulation, lane-dense result.
    acc = jnp.dot(w_ref[...], patches, preferred_element_type=jnp.float32)  # (Cout, HW)

    # Fused BatchNorm (inference form) + ReLU epilogue.
    y = acc * scale_ref[...] + shift_ref[...]
    o_ref[0] = jnp.maximum(y, jnp.float32(0.0)).astype(o_ref.dtype)


def dilated_conv2_forward(x_nchw, w_oihw, bn_scale, bn_shift, *, dilation):
    """Forward pass of dilated_conv2.

    x_nchw: (N, Cin, H, W) float32, w_oihw: (Cout, Cin, 3, 3) (PyTorch layout).
    """
    N, Cin, H, W = x_nchw.shape
    Cout = w_oihw.shape[0]
    d = dilation
    HW = H * W

    # Reorder weights once (tiny): OIHW -> (Cout, kh, kw, Cin) -> (Cout, 9*Cin),
    # matching the tap-major / channel-minor row order of the in-kernel im2col.
    w_mat = jnp.transpose(w_oihw, (0, 2, 3, 1)).reshape(Cout, 9 * Cin).astype(jnp.float32)

    scale = bn_scale.reshape(Cout, 1).astype(jnp.float32)
    shift = bn_shift.reshape(Cout, 1).astype(jnp.float32)

    kernel = functools.partial(_dilated_conv_bn_relu_kernel, dilation=d)

    out = pl.pallas_call(
        kernel,
        out_shape=jax.ShapeDtypeStruct((N, Cout, HW), jnp.float32),
        grid_spec=pltpu.PrefetchScalarGridSpec(
            num_scalar_prefetch=0,
            grid=(N,),
            in_specs=[
                pl.BlockSpec((1, Cin, H, W), lambda i: (i, 0, 0, 0)),
                pl.BlockSpec((Cout, 9 * Cin), lambda i: (0, 0)),
                pl.BlockSpec((Cout, 1), lambda i: (0, 0)),
                pl.BlockSpec((Cout, 1), lambda i: (0, 0)),
            ],
            out_specs=pl.BlockSpec((1, Cout, HW), lambda i: (i, 0, 0)),
            scratch_shapes=[
                pltpu.VMEM((Cin, H + 2 * d, W + 2 * d), jnp.float32),
            ],
        ),
        compiler_params=pltpu.CompilerParams(
            dimension_semantics=("parallel",),
        ),
    )(x_nchw, w_mat, scale, shift)

    # (N, Cout, H*W) -> (N, Cout, H, W): contiguous reshape, no data movement.
    return out.reshape(N, Cout, H, W)


def _reference_forward(x_nchw, w_oihw, bn_scale, bn_shift, *, dilation):
    """Pure-JAX reference (lax conv) for correctness checking."""
    d = dilation
    y = jax.lax.conv_general_dilated(
        x_nchw, w_oihw,
        window_strides=(1, 1),
        padding=((d, d), (d, d)),
        rhs_dilation=(d, d),
        dimension_numbers=("NCHW", "OIHW", "NCHW"),
    )
    y = y * bn_scale.reshape(1, -1, 1, 1) + bn_shift.reshape(1, -1, 1, 1)
    return jnp.maximum(y, 0.0)


if __name__ == "__main__":
    # Small shapes consistent with the module: N=2, Cin=8, Cout=16, H=W=16, dilated=2.
    N, Cin, Cout, H, W = 2, 8, 16, 16, 16
    dilation = 2

    key = jax.random.PRNGKey(0)
    kx, kw = jax.random.split(key)

    x = jax.random.normal(kx, (N, Cin, H, W), dtype=jnp.float32)

    # Deterministic conv weights in PyTorch OIHW layout, roughly kaiming-scaled.
    fan_in = Cin * 3 * 3
    w_oihw = jax.random.normal(kw, (Cout, Cin, 3, 3), dtype=jnp.float32) * (2.0 / fan_in) ** 0.5

    # BatchNorm2d parameters at init: gamma=1, beta=0, running_mean=0, running_var=1.
    eps = 1e-5
    gamma = jnp.ones((Cout,), jnp.float32)
    beta = jnp.zeros((Cout,), jnp.float32)
    running_mean = jnp.zeros((Cout,), jnp.float32)
    running_var = jnp.ones((Cout,), jnp.float32)
    bn_scale = gamma / jnp.sqrt(running_var + eps)
    bn_shift = beta - running_mean * bn_scale

    out = dilated_conv2_forward(x, w_oihw, bn_scale, bn_shift, dilation=dilation)
    out = jax.block_until_ready(out)

    ref = _reference_forward(x, w_oihw, bn_scale, bn_shift, dilation=dilation)
    ref = jax.block_until_ready(ref)

    assert out.shape == (N, Cout, H, W), out.shape
    max_err = float(jnp.max(jnp.abs(out - ref)))
    assert jnp.allclose(out, ref, atol=1e-4, rtol=1e-4), max_err

    print("KERNEL_OK")
</pallas_src>

<mosaic_0001>
module attributes {stable_mosaic.version = 11 : i64} {
  func.func @_dilated_conv_bn_relu_kernel(%arg0: i32, %arg1: memref<1x8x16x16xf32, #tpu.memory_space<vmem>>, %arg2: memref<16x72xf32, #tpu.memory_space<vmem>>, %arg3: memref<16x1xf32, #tpu.memory_space<vmem>>, %arg4: memref<16x1xf32, #tpu.memory_space<vmem>>, %arg5: memref<1x16x256xf32, #tpu.memory_space<vmem>>, %arg6: memref<8x20x20xf32, #tpu.memory_space<vmem>>) attributes {dimension_semantics = [#tpu.dimension_semantics<parallel>], iteration_bounds = array<i64: 2>, scalar_prefetch = 0 : i64, scratch_operands = 1 : i64, tpu.core_type = #tpu.core_type<tc>, window_params = [{transform_indices = @transform_0, window_bounds = array<i64: 1, 8, 16, 16>}, {pipeline_mode = #tpu.pipeline_mode<synchronous>, transform_indices = @transform_1, window_bounds = array<i64: 16, 72>}, {pipeline_mode = #tpu.pipeline_mode<synchronous>, transform_indices = @transform_2, window_bounds = array<i64: 16, 1>}, {pipeline_mode = #tpu.pipeline_mode<synchronous>, transform_indices = @transform_3, window_bounds = array<i64: 16, 1>}, {transform_indices = @transform_4, window_bounds = array<i64: 1, 16, 256>}]} {
    %cst = arith.constant 0.000000e+00 : f32
    %0 = vector.broadcast %cst : f32 to vector<8x20x20xf32>
    %c0 = arith.constant 0 : index
    %c0_0 = arith.constant 0 : index
    %c0_1 = arith.constant 0 : index
    %1 = vector.load %arg6[%c0, %c0_0, %c0_1] : memref<8x20x20xf32, #tpu.memory_space<vmem>>, vector<8x20x20xf32>
    tpu.vector_store %arg6[%c0, %c0_0, %c0_1], %0 {strides = array<i32>} : memref<8x20x20xf32, #tpu.memory_space<vmem>>, vector<8x20x20xf32>,
    %c0_2 = arith.constant 0 : index
    %c0_3 = arith.constant 0 : index
    %c0_4 = arith.constant 0 : index
    %c0_5 = arith.constant 0 : index
    %2 = vector.load %arg1[%c0_2, %c0_3, %c0_4, %c0_5] : memref<1x8x16x16xf32, #tpu.memory_space<vmem>>, vector<1x8x16x16xf32>
    %3 = vector.shape_cast %2 : vector<1x8x16x16xf32> to vector<8x16x16xf32>
    %c0_6 = arith.constant 0 : index
    %c2 = arith.constant 2 : index
    %c2_7 = arith.constant 2 : index
    %4 = vector.load %arg6[%c0_6, %c2, %c2_7] : memref<8x20x20xf32, #tpu.memory_space<vmem>>, vector<8x16x16xf32>
    tpu.vector_store %arg6[%c0_6, %c2, %c2_7], %3 {strides = array<i32>} : memref<8x20x20xf32, #tpu.memory_space<vmem>>, vector<8x16x16xf32>,
    %c0_8 = arith.constant 0 : index
    %c0_9 = arith.constant 0 : index
    %c0_10 = arith.constant 0 : index
    %5 = vector.load %arg6[%c0_8, %c0_9, %c0_10] : memref<8x20x20xf32, #tpu.memory_space<vmem>>, vector<8x16x16xf32>
    %6 = vector.shape_cast %5 : vector<8x16x16xf32> to vector<8x256xf32>
    %c0_11 = arith.constant 0 : index
    %c0_12 = arith.constant 0 : index
    %c2_13 = arith.constant 2 : index
    %7 = vector.load %arg6[%c0_11, %c0_12, %c2_13] : memref<8x20x20xf32, #tpu.memory_space<vmem>>, vector<8x16x16xf32>
    %8 = vector.shape_cast %7 : vector<8x16x16xf32> to vector<8x256xf32>
    %c0_14 = arith.constant 0 : index
    %c0_15 = arith.constant 0 : index
    %c4 = arith.constant 4 : index
    %9 = vector.load %arg6[%c0_14, %c0_15, %c4] : memref<8x20x20xf32, #tpu.memory_space<vmem>>, vector<8x16x16xf32>
    %10 = vector.shape_cast %9 : vector<8x16x16xf32> to vector<8x256xf32>
    %c0_16 = arith.constant 0 : index
    %c2_17 = arith.constant 2 : index
    %c0_18 = arith.constant 0 : index
    %11 = vector.load %arg6[%c0_16, %c2_17, %c0_18] : memref<8x20x20xf32, #tpu.memory_space<vmem>>, vector<8x16x16xf32>
    %12 = vector.shape_cast %11 : vector<8x16x16xf32> to vector<8x256xf32>
    %c0_19 = arith.constant 0 : index
    %c2_20 = arith.constant 2 : index
    %c2_21 = arith.constant 2 : index
    %13 = vector.load %arg6[%c0_19, %c2_20, %c2_21] : memref<8x20x20xf32, #tpu.memory_space<vmem>>, vector<8x16x16xf32>
    %14 = vector.shape_cast %13 : vector<8x16x16xf32> to vector<8x256xf32>
    %c0_22 = arith.constant 0 : index
    %c2_23 = arith.constant 2 : index
    %c4_24 = arith.constant 4 : index
    %15 = vector.load %arg6[%c0_22, %c2_23, %c4_24] : memref<8x20x20xf32, #tpu.memory_space<vmem>>, vector<8x16x16xf32>
    %16 = vector.shape_cast %15 : vector<8x16x16xf32> to vector<8x256xf32>
    %c0_25 = arith.constant 0 : index
    %c4_26 = arith.constant 4 : index
    %c0_27 = arith.constant 0 : index
    %17 = vector.load %arg6[%c0_25, %c4_26, %c0_27] : memref<8x20x20xf32, #tpu.memory_space<vmem>>, vector<8x16x16xf32>
    %18 = vector.shape_cast %17 : vector<8x16x16xf32> to vector<8x256xf32>
    %c0_28 = arith.constant 0 : index
    %c4_29 = arith.constant 4 : index
    %c2_30 = arith.constant 2 : index
    %19 = vector.load %arg6[%c0_28, %c4_29, %c2_30] : memref<8x20x20xf32, #tpu.memory_space<vmem>>, vector<8x16x16xf32>
    %20 = vector.shape_cast %19 : vector<8x16x16xf32> to vector<8x256xf32>
    %c0_31 = arith.constant 0 : index
    %c4_32 = arith.constant 4 : index
    %c4_33 = arith.constant 4 : index
    %21 = vector.load %arg6[%c0_31, %c4_32, %c4_33] : memref<8x20x20xf32, #tpu.memory_space<vmem>>, vector<8x16x16xf32>
    %22 = vector.shape_cast %21 : vector<8x16x16xf32> to vector<8x256xf32>
    %23 = tpu.concatenate %6, %8, %10, %12, %14, %16, %18, %20, %22 in 0 : vector<8x256xf32>, vector<8x256xf32>, vector<8x256xf32>, vector<8x256xf32>, vector<8x256xf32>, vector<8x256xf32>, vector<8x256xf32>, vector<8x256xf32>, vector<8x256xf32> -> vector<72x256xf32>
    %c0_34 = arith.constant 0 : index
    %c0_35 = arith.constant 0 : index
    %24 = vector.load %arg2[%c0_34, %c0_35] : memref<16x72xf32, #tpu.memory_space<vmem>>, vector<16x72xf32>
    %cst_36 = arith.constant dense<0.000000e+00> : vector<16x256xf32>
    %25 = tpu.matmul %24, %23, %cst_36 {dimension_numbers = #tpu.dot_dimension_numbers<[1], [0], [0], [1], [0, 0, 1, 1], [], []>} : vector<16x72xf32>, vector<72x256xf32>, vector<16x256xf32> -> vector<16x256xf32>
    %c0_37 = arith.constant 0 : index
    %c0_38 = arith.constant 0 : index
    %26 = vector.load %arg3[%c0_37, %c0_38] : memref<16x1xf32, #tpu.memory_space<vmem>>, vector<16x1xf32>
    %27 = vector.broadcast %26 : vector<16x1xf32> to vector<16x256xf32>
    %28 = arith.mulf %25, %27 : vector<16x256xf32>
    %c0_39 = arith.constant 0 : index
    %c0_40 = arith.constant 0 : index
    %29 = vector.load %arg4[%c0_39, %c0_40] : memref<16x1xf32, #tpu.memory_space<vmem>>, vector<16x1xf32>
    %30 = vector.broadcast %29 : vector<16x1xf32> to vector<16x256xf32>
    %31 = arith.addf %28, %30 : vector<16x256xf32>
    %cst_41 = arith.constant 0.000000e+00 : f32
    %32 = vector.broadcast %cst_41 : f32 to vector<16x256xf32>
    %33 = arith.maximumf %31, %32 : vector<16x256xf32>
    %c0_42 = arith.constant 0 : index
    %c0_43 = arith.constant 0 : index
    %c0_44 = arith.constant 0 : index
    %34 = vector.load %arg5[%c0_42, %c0_43, %c0_44] : memref<1x16x256xf32, #tpu.memory_space<vmem>>, vector<1x16x256xf32>
    %35 = vector.shape_cast %34 : vector<1x16x256xf32> to vector<16x256xf32>
    %36 = vector.shape_cast %33 : vector<16x256xf32> to vector<1x16x256xf32>
    tpu.vector_store %arg5[%c0_42, %c0_43, %c0_44], %36 {strides = array<i32>} : memref<1x16x256xf32, #tpu.memory_space<vmem>>, vector<1x16x256xf32>,
    return
  }
  func.func @transform_0(%arg0: i32) -> (i32, i32, i32, i32) {
    %c0_i32 = arith.constant 0 : i32
    %c0_i32_0 = arith.constant 0 : i32
    %c0_i32_1 = arith.constant 0 : i32
    %c0_i32_2 = arith.constant 0 : i32
    return %arg0, %c0_i32, %c0_i32_0, %c0_i32_1 : i32, i32, i32, i32
  }
  func.func @transform_1(%arg0: i32) -> (i32, i32) {
    %c0_i32 = arith.constant 0 : i32
    %c0_i32_0 = arith.constant 0 : i32
    %c0_i32_1 = arith.constant 0 : i32
    return %c0_i32, %c0_i32_0 : i32, i32
  }
  func.func @transform_2(%arg0: i32) -> (i32, i32) {
    %c0_i32 = arith.constant 0 : i32
    %c0_i32_0 = arith.constant 0 : i32
    %c0_i32_1 = arith.constant 0 : i32
    return %c0_i32, %c0_i32_0 : i32, i32
  }
  func.func @transform_3(%arg0: i32) -> (i32, i32) {
    %c0_i32 = arith.constant 0 : i32
    %c0_i32_0 = arith.constant 0 : i32
    %c0_i32_1 = arith.constant 0 : i32
    return %c0_i32, %c0_i32_0 : i32, i32
  }
  func.func @transform_4(%arg0: i32) -> (i32, i32, i32) {
    %c0_i32 = arith.constant 0 : i32
    %c0_i32_0 = arith.constant 0 : i32
    %c0_i32_1 = arith.constant 0 : i32
    return %arg0, %c0_i32, %c0_i32_0 : i32, i32, i32
  }
}

</mosaic_0001>

<llo_original>
// kernel: tpu_custom_call.1
$region0: #{tpu_custom_call.1}
  #allocation0 [shape = 'u32[]', space=smem, size = 0x4, offset = 0x4, fixed_abs, tag = 'smem constant byte address 0x4 - core index']
  #allocation1 [shape = 'u32[144,128]{1,0:T(1,128)}', space=vmem, size = 0x12000, scoped, tag = 'internal scratch']
  #allocation2 [shape = 'f32[8,20,20]{2,1,0:T(8,128)}', space=vmem, size = 0x18000, scoped, tag = 'scratch operand']
  %s0 = inlined_call_operand.hbm [shape: f32[2,8,16,16], index: 0, kind: input, shape index: {}]
  %s1 = inlined_call_operand.vmem [shape: f32[16,72], index: 1, kind: input, shape index: {}]
  %s2 = inlined_call_operand.vmem [shape: f32[16,1], index: 2, kind: input, shape index: {}]
  %s3 = inlined_call_operand.vmem [shape: f32[16,1], index: 3, kind: input, shape index: {}]
  %s4 = inlined_call_operand.hbm [shape: f32[2,16,256], index: 4, kind: output, shape index: {}]
  %s5 = sld [smem:[#allocation0]]
  $region53: #{tpu_custom_call.1} parent=0
    _
  %s7 = ssub.s32 1, %s5
  %s8 = scalar_select 0, %s7, %s5
  $region1: #{tpu_custom_call.1} parent=0
    #allocation3 [shape = 'u8[131072]{0}', space=vmem, size = 0x20000, scoped, tag = 'input window, operand 0']
    #allocation4 [shape = 's32[2]{0}', space=sflag, size = 0x8, scoped, tag = 'scoped memory for tpu_custom_call.1']
    #allocation5 [shape = 's32[2]{0}', space=sflag, size = 0x8, scoped, tag = 'scoped memory for tpu_custom_call.1']
    #allocation6 [shape = 'u8[32768]{0}', space=vmem, size = 0x8000, scoped, tag = 'output window, operand 0']
    %9 = vsyncpa [#allocation4], 0
    %s10 = scalar_lea.sflag [#allocation4], 1
    %11 = vsyncpa %s10, 0
    %12 = vsyncpa [#allocation5], 0
    %s13 = scalar_lea.sflag [#allocation5], 1
    %14 = vsyncpa %s13, 0
    loop: start=0, step=1, limit=4
    $region2: #{tpu_custom_call.1} parent=1 // loop_pre_header
      _
    $region3: #{tpu_custom_call.1} parent=1 // loop_header
      %s16 = sphi 0, %s20
      %p17 = scmp.ge.s32.totalorder %s16, 4
      %s26 = sphi 0, %s28
      %s29 = sphi 0, %s26
      %s30 = sphi 0, %s29
      %s46 = sphi 0, %s30
      %s50 = sphi 0, %s50
      %s52 = sphi 0, %s50
      %s53 = sphi 0, %s52
      %s67 = sphi 0, %s53
      %s71 = sphi 0, %s71
      %s73 = sphi 0, %s71
      %s74 = sphi 0, %s73
      %s88 = sphi 0, %s74
      %s92 = sphi 0, %s92
      %s94 = sphi 0, %s92
      %s95 = sphi 0, %s94
      %s109 = sphi 0, %s95
      %s115 = sphi 0, %s117
      %s118 = sphi 0, %s115
      %s119 = sphi 0, %s118
      %s135 = sphi 0, %s119
    $region4: #{tpu_custom_call.1} parent=1 // loop_header_branch
      %19 = sbr.rel (%p17) target = $region8
    $region5: #{tpu_custom_call.1} parent=1 // loop_body
      %s21 = ssub.s32 %s16, 1
      %s22 = ssub.s32 %s16, 2
      %s23 = sadd.s32 %s16, 1
      %s24 = ssub.s32 %s16, %s23
      %p25 = scmp.eq.s32.totalorder %s24, 0
      %s27 = sadd.s32 %s26, 1
      %s28 = scalar_select %p25, %s26, %s27
      %p31 = pneg %p25
      %p32 = scmp.eq.s32.totalorder %s16, 1
      %p33 = por %p31, %p32
      %p34 = scmp.ne.s32.totalorder %s26, %s29
      %p35 = scmp.eq.s32.totalorder %s16, 0
      %p36 = por %p34, %p35
      %p37 = scmp.ne.s32.totalorder %s26, %s29
      %p38 = scmp.eq.s32.totalorder %s21, 1
      %p39 = por %p37, %p38
      %p40 = scmp.ne.s32.totalorder %s29, %s30
      %p41 = scmp.eq.s32.totalorder %s21, 0
      %p42 = por %p40, %p41
      %p43 = scmp.ne.s32.totalorder %s29, %s30
      %p44 = scmp.eq.s32.totalorder %s22, 1
      %p45 = por %p43, %p44
      %p47 = scmp.ne.s32.totalorder %s30, %s46
      %p48 = scmp.eq.s32.totalorder %s22, 0
      %p49 = por %p47, %p48
      %s51 = sadd.s32 %s50, 1
      %p54 = scmp.eq.s32.totalorder %s16, 1
      %p55 = scmp.ne.s32.totalorder %s50, %s52
      %p56 = scmp.eq.s32.totalorder %s16, 0
      %p57 = por %p55, %p56
      %p58 = scmp.ne.s32.totalorder %s50, %s52
      %p59 = scmp.eq.s32.totalorder %s21, 1
      %p60 = por %p58, %p59
      %p61 = scmp.ne.s32.totalorder %s52, %s53
      %p62 = scmp.eq.s32.totalorder %s21, 0
      %p63 = por %p61, %p62
      %p64 = scmp.ne.s32.totalorder %s52, %s53
      %p65 = scmp.eq.s32.totalorder %s22, 1
      %p66 = por %p64, %p65
      %p68 = scmp.ne.s32.totalorder %s53, %s67
      %p69 = scmp.eq.s32.totalorder %s22, 0
      %p70 = por %p68, %p69
      %s72 = sadd.s32 %s71, 1
      %p75 = scmp.eq.s32.totalorder %s16, 1
      %p76 = scmp.ne.s32.totalorder %s71, %s73
      %p77 = scmp.eq.s32.totalorder %s16, 0
      %p78 = por %p76, %p77
      %p79 = scmp.ne.s32.totalorder %s71, %s73
      %p80 = scmp.eq.s32.totalorder %s21, 1
      %p81 = por %p79, %p80
      %p82 = scmp.ne.s32.totalorder %s73, %s74
      %p83 = scmp.eq.s32.totalorder %s21, 0
      %p84 = por %p82, %p83
      %p85 = scmp.ne.s32.totalorder %s73, %s74
      %p86 = scmp.eq.s32.totalorder %s22, 1
      %p87 = por %p85, %p86
      %p89 = scmp.ne.s32.totalorder %s74, %s88
      %p90 = scmp.eq.s32.totalorder %s22, 0
      %p91 = por %p89, %p90
      %s93 = sadd.s32 %s92, 1
      %p96 = scmp.eq.s32.totalorder %s16, 1
      %p97 = scmp.ne.s32.totalorder %s92, %s94
      %p98 = scmp.eq.s32.totalorder %s16, 0
      %p99 = por %p97, %p98
      %p100 = scmp.ne.s32.totalorder %s92, %s94
      %p101 = scmp.eq.s32.totalorder %s21, 1
      %p102 = por %p100, %p101
      %p103 = scmp.ne.s32.totalorder %s94, %s95
      %p104 = scmp.eq.s32.totalorder %s21, 0
      %p105 = por %p103, %p104
      %p106 = scmp.ne.s32.totalorder %s94, %s95
      %p107 = scmp.eq.s32.totalorder %s22, 1
      %p108 = por %p106, %p107
      %p110 = scmp.ne.s32.totalorder %s95, %s109
      %p111 = scmp.eq.s32.totalorder %s22, 0
      %p112 = por %p110, %p111
      %s113 = ssub.s32 %s16, %s23
      %p114 = scmp.eq.s32.totalorder %s113, 0
      %s116 = sadd.s32 %s115, 1
      %s117 = scalar_select %p114, %s115, %s116
      %p120 = pneg %p114
      %p121 = scmp.eq.s32.totalorder %s16, 1
      %p122 = por %p120, %p121
      %p123 = scmp.ne.s32.totalorder %s115, %s118
      %p124 = scmp.eq.s32.totalorder %s16, 0
      %p125 = por %p123, %p124
      %p126 = scmp.ne.s32.totalorder %s115, %s118
      %p127 = scmp.eq.s32.totalorder %s21, 1
      %p128 = por %p126, %p127
      %p129 = scmp.ne.s32.totalorder %s118, %s119
      %p130 = scmp.eq.s32.totalorder %s21, 0
      %p131 = por %p129, %p130
      %p132 = scmp.ne.s32.totalorder %s118, %s119
      %p133 = scmp.eq.s32.totalorder %s22, 1
      %p134 = por %p132, %p133
      %p136 = scmp.ne.s32.totalorder %s119, %s135
      %p137 = scmp.eq.s32.totalorder %s22, 0
      %p138 = por %p136, %p137
      %p139 = scmp.le.s32.totalorder 1, %s16
      %p140 = scmp.lt.s32.totalorder %s16, 3
      %p141 = pnand %p139, %p140
      %p142 = pneg %p141
      // Predicated region
      $region9: #{tpu_custom_call.1} parent=5 // pred_check
        _
      $region10: #{tpu_custom_call.1} parent=5 // pred_check_branch
        %144 = sbr.rel (%p141) target = $region12
      $region11: #{tpu_custom_call.1} parent=5 // pred_region
        %s145 = ssub.s32 %s16, 1
        // Predicated region
        $region13: #{tpu_custom_call.1} parent=11 // pred_check
          %p146 = pneg %p63
        $region14: #{tpu_custom_call.1} parent=11 // pred_check_branch
          %148 = sbr.rel (%p146) target = $region16
        $region15: #{tpu_custom_call.1} parent=11 // pred_region
          _
        $region16: #{tpu_custom_call.1} parent=11 // pred_fallthru
          _
        // Predicated region
        $region17: #{tpu_custom_call.1} parent=11 // pred_check
          %p149 = pneg %p84
        $region18: #{tpu_custom_call.1} parent=11 // pred_check_branch
          %151 = sbr.rel (%p149) target = $region20
        $region19: #{tpu_custom_call.1} parent=11 // pred_region
          _
        $region20: #{tpu_custom_call.1} parent=11 // pred_fallthru
          _
        // Predicated region
        $region21: #{tpu_custom_call.1} parent=11 // pred_check
          %p152 = pneg %p105
        $region22: #{tpu_custom_call.1} parent=11 // pred_check_branch
          %154 = sbr.rel (%p152) target = $region24
        $region23: #{tpu_custom_call.1} parent=11 // pred_region
          _
        $region24: #{tpu_custom_call.1} parent=11 // pred_fallthru
          _
      $region12: #{tpu_custom_call.1} parent=5 // pred_fallthru
        _
      %p155 = scmp.lt.s32.totalorder %s16, 2
      // Predicated region
      $region25: #{tpu_custom_call.1} parent=5 // pred_check
        %p156 = pneg %p155
      $region26: #{tpu_custom_call.1} parent=5 // pred_check_branch
        %158 = sbr.rel (%p156) target = $region28
      $region27: #{tpu_custom_call.1} parent=5 // pred_region
        // Predicated region
        $region29: #{tpu_custom_call.1} parent=27 // pred_check
          %p159 = pneg %p36
        $region30: #{tpu_custom_call.1} parent=27 // pred_check_branch
          %161 = sbr.rel (%p159) target = $region32
        $region31: #{tpu_custom_call.1} parent=27 // pred_region
          %s162 = sand.u32 %s26, 1
          %s163 = scalar_lea.sflag [#allocation4], %s162
          %s164 = sand.u32 %s26, 1
          %s165 = smul.addr %s164, 128
          %s166 = scalar_lea.vmem [#allocation3], %s165
          %s168 = ssub.s32 2048, 2048
          %169 = vsyncadd %s163, %s168
          %s170 = smul.addr %s16, 16
          %s171 = smul.addr %s170, 128
          %s172 = scalar_lea.hbm %s0, %s171
          %s173 = sshll.u32 %s166, 4
          %s174 = int_to_ptr.vmem [resolvable:$true] %s173
          %179 = dma.hbm_to_vmem [thread:$0]  %s172, 2048, %s174, %s163, 128, 128, 8
        $region32: #{tpu_custom_call.1} parent=27 // pred_fallthru
          _
      $region28: #{tpu_custom_call.1} parent=5 // pred_fallthru
        _
      %p180 = scmp.le.s32.totalorder 1, %s16
      %p181 = scmp.lt.s32.totalorder %s16, 3
      %p182 = pnand %p180, %p181
      %p183 = pneg %p182
      // Predicated region
      $region33: #{tpu_custom_call.1} parent=5 // pred_check
        _
      $region34: #{tpu_custom_call.1} parent=5 // pred_check_branch
        %185 = sbr.rel (%p182) target = $region36
      $region35: #{tpu_custom_call.1} parent=5 // pred_region
        %s186 = ssub.s32 %s16, 1
        %s187 = sand.u32 %s29, 1
        %s188 = scalar_lea.sflag [#allocation4], %s187
        %s189 = sand.u32 %s29, 1
        %s190 = smul.addr %s189, 128
        %s191 = scalar_lea.vmem [#allocation3], %s190
        // Predicated region
        $region37: #{tpu_custom_call.1} parent=35 // pred_check
          %p192 = pneg %p42
        $region38: #{tpu_custom_call.1} parent=35 // pred_check_branch
          %194 = sbr.rel (%p192) target = $region40
        $region39: #{tpu_custom_call.1} parent=35 // pred_region
          %195 = dma.done %s188, 2048
        $region40: #{tpu_custom_call.1} parent=35 // pred_fallthru
          _
        %s196 = sand.u32 %s29, 1
        %s197 = scalar_lea.sflag [#allocation4], %s196
        %s198 = sand.u32 %s29, 1
        %s199 = smul.addr %s198, 128
        %s200 = scalar_lea.vmem [#allocation3], %s199
        %p201 = pneg %p42
        %p202 = pneg %p39
        %p203 = pneg %p63
        %p204 = pneg %p60
        %p205 = pneg %p84
        %p206 = pneg %p81
        %p207 = pneg %p105
        %p208 = pneg %p102
        %p209 = pneg %p131
        %p210 = pneg %p128
        %s211 = sand.u32 %s118, 1
        %s212 = scalar_lea.sflag [#allocation5], %s211
        %s213 = sand.u32 %s118, 1
        %s214 = smul.addr %s213, 32
        %s215 = scalar_lea.vmem [#allocation6], %s214
        %vm216 = vcmask 162816
        %217 = vst.msk [vmem:[#allocation2] sm:$0xff] %vm216, 0.0
        %218 = vst.msk [vmem:[#allocation2 + $0x8] sm:$0xff] %vm216, 0.0
        %vm219 = vcmask 158720
        %220 = vst.msk [vmem:[#allocation2 + $0x10] sm:$0xf] %vm219, 0.0
        %221 = vst.msk [vmem:[#allocation2 + $0x18] sm:$0xff] %vm216, 0.0
        %222 = vst.msk [vmem:[#allocation2 + $0x20] sm:$0xff] %vm216, 0.0
        %223 = vst.msk [vmem:[#allocation2 + $0x28] sm:$0xf] %vm219, 0.0
        %224 = vst.msk [vmem:[#allocation2 + $0x30] sm:$0xff] %vm216, 0.0
        %225 = vst.msk [vmem:[#allocation2 + $0x38] sm:$0xff] %vm216, 0.0
        %226 = vst.msk [vmem:[#allocation2 + $0x40] sm:$0xf] %vm219, 0.0
        %227 = vst.msk [vmem:[#allocation2 + $0x48] sm:$0xff] %vm216, 0.0
        %228 = vst.msk [vmem:[#allocation2 + $0x50] sm:$0xff] %vm216, 0.0
        %229 = vst.msk [vmem:[#allocation2 + $0x58] sm:$0xf] %vm219, 0.0
        %230 = vst.msk [vmem:[#allocation2 + $0x60] sm:$0xff] %vm216, 0.0
        %231 = vst.msk [vmem:[#allocation2 + $0x68] sm:$0xff] %vm216, 0.0
        %232 = vst.msk [vmem:[#allocation2 + $0x70] sm:$0xf] %vm219, 0.0
        %233 = vst.msk [vmem:[#allocation2 + $0x78] sm:$0xff] %vm216, 0.0
        %234 = vst.msk [vmem:[#allocation2 + $0x80] sm:$0xff] %vm216, 0.0
        %235 = vst.msk [vmem:[#allocation2 + $0x88] sm:$0xf] %vm219, 0.0
        %236 = vst.msk [vmem:[#allocation2 + $0x90] sm:$0xff] %vm216, 0.0
        %237 = vst.msk [vmem:[#allocation2 + $0x98] sm:$0xff] %vm216, 0.0
        %238 = vst.msk [vmem:[#allocation2 + $0xa0] sm:$0xf] %vm219, 0.0
        %239 = vst.msk [vmem:[#allocation2 + $0xa8] sm:$0xff] %vm216, 0.0
        %240 = vst.msk [vmem:[#allocation2 + $0xb0] sm:$0xff] %vm216, 0.0
        %241 = vst.msk [vmem:[#allocation2 + $0xb8] sm:$0xf] %vm219, 0.0
        %v242 = vld [vmem:[%s191] sm:$0xff]
        %v243 = vld [vmem:[%s191 + $0x8] sm:$0xff]
        %v244 = vld [vmem:[%s191 + $0x10] sm:$0xff]
        %v245 = vld [vmem:[%s191 + $0x18] sm:$0xff]
        %v246 = vld [vmem:[%s191 + $0x20] sm:$0xff]
        %v247 = vld [vmem:[%s191 + $0x28] sm:$0xff]
        %v248 = vld [vmem:[%s191 + $0x30] sm:$0xff]
        %v249 = vld [vmem:[%s191 + $0x38] sm:$0xff]
        %v250 = vld [vmem:[%s191 + $0x40] sm:$0xff]
        %v251 = vld [vmem:[%s191 + $0x48] sm:$0xff]
        %v252 = vld [vmem:[%s191 + $0x50] sm:$0xff]
        %v253 = vld [vmem:[%s191 + $0x58] sm:$0xff]
        %v254 = vld [vmem:[%s191 + $0x60] sm:$0xff]
        %v255 = vld [vmem:[%s191 + $0x68] sm:$0xff]
        %v256 = vld [vmem:[%s191 + $0x70] sm:$0xff]
        %v257 = vld [vmem:[%s191 + $0x78] sm:$0xff]
        %274 = vrot.lane.b32.xlu0 %v242, 2
        %v275 = vpop.permute.xlu0 %274
        %276 = vrot.lane.b32.xlu0 %v243, 2
        %v277 = vpop.permute.xlu0 %276
        %278 = vrot.lane.b32.xlu0 %v244, 2
        %v279 = vpop.permute.xlu0 %278
        %280 = vrot.lane.b32.xlu0 %v245, 2
        %v281 = vpop.permute.xlu0 %280
        %282 = vrot.lane.b32.xlu0 %v246, 2
        %v283 = vpop.permute.xlu0 %282
        %284 = vrot.lane.b32.xlu0 %v247, 2
        %v285 = vpop.permute.xlu0 %284
        %286 = vrot.lane.b32.xlu0 %v248, 2
        %v287 = vpop.permute.xlu0 %286
        %288 = vrot.lane.b32.xlu0 %v249, 2
        %v289 = vpop.permute.xlu0 %288
        %290 = vrot.lane.b32.xlu0 %v250, 2
        %v291 = vpop.permute.xlu0 %290
        %292 = vrot.lane.b32.xlu0 %v251, 2
        %v293 = vpop.permute.xlu0 %292
        %294 = vrot.lane.b32.xlu0 %v252, 2
        %v295 = vpop.permute.xlu0 %294
        %296 = vrot.lane.b32.xlu0 %v253, 2
        %v297 = vpop.permute.xlu0 %296
        %298 = vrot.lane.b32.xlu0 %v254, 2
        %v299 = vpop.permute.xlu0 %298
        %300 = vrot.lane.b32.xlu0 %v255, 2
        %v301 = vpop.permute.xlu0 %300
        %302 = vrot.lane.b32.xlu0 %v256, 2
        %v303 = vpop.permute.xlu0 %302
        %304 = vrot.lane.b32.xlu0 %v257, 2
        %v305 = vpop.permute.xlu0 %304
        %vm322 = vcmask 146448
        %323 = vst.msk [vmem:[#allocation2 + $0x2] sm:$0xff] %vm322, %v275
        %324 = vst.msk [vmem:[#allocation2 + $0xa] sm:$0xff] %vm322, %v277
        %325 = vst.msk [vmem:[#allocation2 + $0x1a] sm:$0xff] %vm322, %v279
        %326 = vst.msk [vmem:[#allocation2 + $0x22] sm:$0xff] %vm322, %v281
        %327 = vst.msk [vmem:[#allocation2 + $0x32] sm:$0xff] %vm322, %v283
        %328 = vst.msk [vmem:[#allocation2 + $0x3a] sm:$0xff] %vm322, %v285
        %329 = vst.msk [vmem:[#allocation2 + $0x4a] sm:$0xff] %vm322, %v287
        %330 = vst.msk [vmem:[#allocation2 + $0x52] sm:$0xff] %vm322, %v289
        %331 = vst.msk [vmem:[#allocation2 + $0x62] sm:$0xff] %vm322, %v291
        %332 = vst.msk [vmem:[#allocation2 + $0x6a] sm:$0xff] %vm322, %v293
        %333 = vst.msk [vmem:[#allocation2 + $0x7a] sm:$0xff] %vm322, %v295
        %334 = vst.msk [vmem:[#allocation2 + $0x82] sm:$0xff] %vm322, %v297
        %335 = vst.msk [vmem:[#allocation2 + $0x92] sm:$0xff] %vm322, %v299
        %336 = vst.msk [vmem:[#allocation2 + $0x9a] sm:$0xff] %vm322, %v301
        %337 = vst.msk [vmem:[#allocation2 + $0xaa] sm:$0xff] %vm322, %v303
        %338 = vst.msk [vmem:[#allocation2 + $0xb2] sm:$0xff] %vm322, %v305
        %v339 = vld [vmem:[#allocation2] sm:$0xff]
        %v340 = vld [vmem:[#allocation2 + $0x8] sm:$0xff]
        %v341 = vld [vmem:[#allocation2 + $0x18] sm:$0xff]
        %v342 = vld [vmem:[#allocation2 + $0x20] sm:$0xff]
        %v343 = vld [vmem:[#allocation2 + $0x30] sm:$0xff]
        %v344 = vld [vmem:[#allocation2 + $0x38] sm:$0xff]
        %v345 = vld [vmem:[#allocation2 + $0x48] sm:$0xff]
        %v346 = vld [vmem:[#allocation2 + $0x50] sm:$0xff]
        %v347 = vld [vmem:[#allocation2 + $0x60] sm:$0xff]
        %v348 = vld [vmem:[#allocation2 + $0x68] sm:$0xff]
        %v349 = vld [vmem:[#allocation2 + $0x78] sm:$0xff]
        %v350 = vld [vmem:[#allocation2 + $0x80] sm:$0xff]
        %v351 = vld [vmem:[#allocation2 + $0x90] sm:$0xff]
        %v352 = vld [vmem:[#allocation2 + $0x98] sm:$0xff]
        %v353 = vld [vmem:[#allocation2 + $0xa8] sm:$0xff]
        %v354 = vld [vmem:[#allocation2 + $0xb0] sm:$0xff]
        %v355 = vcombine.low %v339, %v343
        %v356 = vcombine.high %v339, %v343
        %v358 = vunpack.c.l.s4 1983009808
        %v359 = vunpack.c.0.s8 %v358
        %v360 = vlaneseq
        %v361 = vshrl.u32 %v360, 7
        %v362 = vsub.s32 %v359, %v361
        %v363 = vrot.slane %v355, %v362
        %v365 = vunpack.c.l.s4 1983009808
        %v366 = vunpack.c.0.s8 %v365
        %v367 = vlaneseq
        %v368 = vshrl.u32 %v367, 7
        %v369 = vsub.s32 %v366, %v368
        %v370 = vrot.slane %v356, %v369
        %v371 = vcombine.low %v341, %v345
        %v372 = vcombine.high %v341, %v345
        %v374 = vunpack.c.l.s4 1983009808
        %v375 = vunpack.c.0.s8 %v374
        %v376 = vlaneseq
        %v377 = vshrl.u32 %v376, 7
        %v378 = vsub.s32 %v375, %v377
        %v379 = vrot.slane %v371, %v378
        %v381 = vunpack.c.l.s4 1983009808
        %v382 = vunpack.c.0.s8 %v381
        %v383 = vlaneseq
        %v384 = vshrl.u32 %v383, 7
        %v385 = vsub.s32 %v382, %v384
        %v386 = vrot.slane %v372, %v385
        %v387 = vcombine.low %v347, %v351
        %v388 = vcombine.high %v347, %v351
        %v390 = vunpack.c.l.s4 1983009808
        %v391 = vunpack.c.0.s8 %v390
        %v392 = vlaneseq
        %v393 = vshrl.u32 %v392, 7
        %v394 = vsub.s32 %v391, %v393
        %v395 = vrot.slane %v387, %v394
        %v397 = vunpack.c.l.s4 1983009808
        %v398 = vunpack.c.0.s8 %v397
        %v399 = vlaneseq
        %v400 = vshrl.u32 %v399, 7
        %v401 = vsub.s32 %v398, %v400
        %v402 = vrot.slane %v388, %v401
        %v403 = vcombine.low %v349, %v353
        %v404 = vcombine.high %v349, %v353
        %v406 = vunpack.c.l.s4 1983009808
        %v407 = vunpack.c.0.s8 %v406
        %v408 = vlaneseq
        %v409 = vshrl.u32 %v408, 7
        %v410 = vsub.s32 %v407, %v409
        %v411 = vrot.slane %v403, %v410
        %v413 = vunpack.c.l.s4 1983009808
        %v414 = vunpack.c.0.s8 %v413
        %v415 = vlaneseq
        %v416 = vshrl.u32 %v415, 7
        %v417 = vsub.s32 %v414, %v416
        %v418 = vrot.slane %v404, %v417
        %v419 = vcombine.low %v363, %v379
        %v420 = vcombine.high %v363, %v379
        %v422 = vunpack.c.l.s4 1934713408
        %v423 = vunpack.c.0.s8 %v422
        %v424 = vlaneseq
        %v425 = vshrl.u32 %v424, 7
        %v426 = vsub.s32 %v423, %v425
        %v427 = vrot.slane %v419, %v426
        %v429 = vunpack.c.l.s4 1934713408
        %v430 = vunpack.c.0.s8 %v429
        %v431 = vlaneseq
        %v432 = vshrl.u32 %v431, 7
        %v433 = vsub.s32 %v430, %v432
        %v434 = vrot.slane %v420, %v433
        %v435 = vcombine.low %v370, %v386
        %v436 = vcombine.high %v370, %v386
        %v438 = vunpack.c.l.s4 1934713408
        %v439 = vunpack.c.0.s8 %v438
        %v440 = vlaneseq
        %v441 = vshrl.u32 %v440, 7
        %v442 = vsub.s32 %v439, %v441
        %v443 = vrot.slane %v435, %v442
        %v445 = vunpack.c.l.s4 1934713408
        %v446 = vunpack.c.0.s8 %v445
        %v447 = vlaneseq
        %v448 = vshrl.u32 %v447, 7
        %v449 = vsub.s32 %v446, %v448
        %v450 = vrot.slane %v436, %v449
        %v451 = vcombine.low %v395, %v411
        %v452 = vcombine.high %v395, %v411
        %v454 = vunpack.c.l.s4 1934713408
        %v455 = vunpack.c.0.s8 %v454
        %v456 = vlaneseq
        %v457 = vshrl.u32 %v456, 7
        %v458 = vsub.s32 %v455, %v457
        %v459 = vrot.slane %v451, %v458
        %v461 = vunpack.c.l.s4 1934713408
        %v462 = vunpack.c.0.s8 %v461
        %v463 = vlaneseq
        %v464 = vshrl.u32 %v463, 7
        %v465 = vsub.s32 %v462, %v464
        %v466 = vrot.slane %v452, %v465
        %v467 = vcombine.low %v402, %v418
        %v468 = vcombine.high %v402, %v418
        %v470 = vunpack.c.l.s4 1934713408
        %v471 = vunpack.c.0.s8 %v470
        %v472 = vlaneseq
        %v473 = vshrl.u32 %v472, 7
        %v474 = vsub.s32 %v471, %v473
        %v475 = vrot.slane %v467, %v474
        %v477 = vunpack.c.l.s4 1934713408
        %v478 = vunpack.c.0.s8 %v477
        %v479 = vlaneseq
        %v480 = vshrl.u32 %v479, 7
        %v481 = vsub.s32 %v478, %v480
        %v482 = vrot.slane %v468, %v481
        %v483 = vcombine.low %v427, %v459
        %v484 = vcombine.high %v427, %v459
        %v485 = vcombine.low %v434, %v466
        %v486 = vcombine.high %v434, %v466
        %v487 = vcombine.low %v443, %v475
        %v488 = vcombine.high %v443, %v475
        %v489 = vcombine.low %v450, %v482
        %v490 = vcombine.high %v450, %v482
        %v491 = vcombine.low %v340, %v344
        %v492 = vcombine.high %v340, %v344
        %v494 = vunpack.c.l.s4 1983009808
        %v495 = vunpack.c.0.s8 %v494
        %v496 = vlaneseq
        %v497 = vshrl.u32 %v496, 7
        %v498 = vsub.s32 %v495, %v497
        %v499 = vrot.slane %v491, %v498
        %v501 = vunpack.c.l.s4 1983009808
        %v502 = vunpack.c.0.s8 %v501
        %v503 = vlaneseq
        %v504 = vshrl.u32 %v503, 7
        %v505 = vsub.s32 %v502, %v504
        %v506 = vrot.slane %v492, %v505
        %v507 = vcombine.low %v342, %v346
        %v508 = vcombine.high %v342, %v346
        %v510 = vunpack.c.l.s4 1983009808
        %v511 = vunpack.c.0.s8 %v510
        %v512 = vlaneseq
        %v513 = vshrl.u32 %v512, 7
        %v514 = vsub.s32 %v511, %v513
        %v515 = vrot.slane %v507, %v514
        %v517 = vunpack.c.l.s4 1983009808
        %v518 = vunpack.c.0.s8 %v517
        %v519 = vlaneseq
        %v520 = vshrl.u32 %v519, 7
        %v521 = vsub.s32 %v518, %v520
        %v522 = vrot.slane %v508, %v521
        %v523 = vcombine.low %v348, %v352
        %v524 = vcombine.high %v348, %v352
        %v526 = vunpack.c.l.s4 1983009808
        %v527 = vunpack.c.0.s8 %v526
        %v528 = vlaneseq
        %v529 = vshrl.u32 %v528, 7
        %v530 = vsub.s32 %v527, %v529
        %v531 = vrot.slane %v523, %v530
        %v533 = vunpack.c.l.s4 1983009808
        %v534 = vunpack.c.0.s8 %v533
        %v535 = vlaneseq
        %v536 = vshrl.u32 %v535, 7
        %v537 = vsub.s32 %v534, %v536
        %v538 = vrot.slane %v524, %v537
        %v539 = vcombine.low %v350, %v354
        %v540 = vcombine.high %v350, %v354
        %v542 = vunpack.c.l.s4 1983009808
        %v543 = vunpack.c.0.s8 %v542
        %v544 = vlaneseq
        %v545 = vshrl.u32 %v544, 7
        %v546 = vsub.s32 %v543, %v545
        %v547 = vrot.slane %v539, %v546
        %v549 = vunpack.c.l.s4 1983009808
        %v550 = vunpack.c.0.s8 %v549
        %v551 = vlaneseq
        %v552 = vshrl.u32 %v551, 7
        %v553 = vsub.s32 %v550, %v552
        %v554 = vrot.slane %v540, %v553
        %v555 = vcombine.low %v499, %v515
        %v556 = vcombine.high %v499, %v515
        %v558 = vunpack.c.l.s4 1934713408
        %v559 = vunpack.c.0.s8 %v558
        %v560 = vlaneseq
        %v561 = vshrl.u32 %v560, 7
        %v562 = vsub.s32 %v559, %v561
        %v563 = vrot.slane %v555, %v562
        %v565 = vunpack.c.l.s4 1934713408
        %v566 = vunpack.c.0.s8 %v565
        %v567 = vlaneseq
        %v568 = vshrl.u32 %v567, 7
        %v569 = vsub.s32 %v566, %v568
        %v570 = vrot.slane %v556, %v569
        %v571 = vcombine.low %v506, %v522
        %v572 = vcombine.high %v506, %v522
        %v574 = vunpack.c.l.s4 1934713408
        %v575 = vunpack.c.0.s8 %v574
        %v576 = vlaneseq
        %v577 = vshrl.u32 %v576, 7
        %v578 = vsub.s32 %v575, %v577
        %v579 = vrot.slane %v571, %v578
        %v581 = vunpack.c.l.s4 1934713408
        %v582 = vunpack.c.0.s8 %v581
        %v583 = vlaneseq
        %v584 = vshrl.u32 %v583, 7
        %v585 = vsub.s32 %v582, %v584
        %v586 = vrot.slane %v572, %v585
        %v587 = vcombine.low %v531, %v547
        %v588 = vcombine.high %v531, %v547
        %v590 = vunpack.c.l.s4 1934713408
        %v591 = vunpack.c.0.s8 %v590
        %v592 = vlaneseq
        %v593 = vshrl.u32 %v592, 7
        %v594 = vsub.s32 %v591, %v593
        %v595 = vrot.slane %v587, %v594
        %v597 = vunpack.c.l.s4 1934713408
        %v598 = vunpack.c.0.s8 %v597
        %v599 = vlaneseq
        %v600 = vshrl.u32 %v599, 7
        %v601 = vsub.s32 %v598, %v600
        %v602 = vrot.slane %v588, %v601
        %v603 = vcombine.low %v538, %v554
        %v604 = vcombine.high %v538, %v554
        %v606 = vunpack.c.l.s4 1934713408
        %v607 = vunpack.c.0.s8 %v606
        %v608 = vlaneseq
        %v609 = vshrl.u32 %v608, 7
        %v610 = vsub.s32 %v607, %v609
        %v611 = vrot.slane %v603, %v610
        %v613 = vunpack.c.l.s4 1934713408
        %v614 = vunpack.c.0.s8 %v613
        %v615 = vlaneseq
        %v616 = vshrl.u32 %v615, 7
        %v617 = vsub.s32 %v614, %v616
        %v618 = vrot.slane %v604, %v617
        %v619 = vcombine.low %v563, %v595
        %v620 = vcombine.high %v563, %v595
        %v621 = vcombine.low %v570, %v602
        %v622 = vcombine.high %v570, %v602
        %v623 = vcombine.low %v579, %v611
        %v624 = vcombine.high %v579, %v611
        %v625 = vcombine.low %v586, %v618
        %v626 = vcombine.high %v586, %v618
        %628 = vrot.lane.b32.xlu0 %v484, 16
        %v629 = vpop.permute.xlu0 %628
        %632 = vrot.lane.b32.xlu0 %v485, 32
        %v633 = vpop.permute.xlu0 %632
        %636 = vrot.lane.b32.xlu0 %v486, 48
        %v637 = vpop.permute.xlu0 %636
        %640 = vrot.lane.b32.xlu0 %v487, 64
        %v641 = vpop.permute.xlu0 %640
        %644 = vrot.lane.b32.xlu0 %v488, 80
        %v645 = vpop.permute.xlu0 %644
        %648 = vrot.lane.b32.xlu0 %v489, 96
        %v649 = vpop.permute.xlu0 %648
        %652 = vrot.lane.b32.xlu0 %v490, 112
        %v653 = vpop.permute.xlu0 %652
        %656 = vrot.lane.b32.xlu0 %v620, 16
        %v657 = vpop.permute.xlu0 %656
        %660 = vrot.lane.b32.xlu0 %v621, 32
        %v661 = vpop.permute.xlu0 %660
        %664 = vrot.lane.b32.xlu0 %v622, 48
        %v665 = vpop.permute.xlu0 %664
        %668 = vrot.lane.b32.xlu0 %v623, 64
        %v669 = vpop.permute.xlu0 %668
        %672 = vrot.lane.b32.xlu0 %v624, 80
        %v673 = vpop.permute.xlu0 %672
        %676 = vrot.lane.b32.xlu0 %v625, 96
        %v677 = vpop.permute.xlu0 %676
        %680 = vrot.lane.b32.xlu0 %v626, 112
        %v681 = vpop.permute.xlu0 %680
        %vm683 = vcmask 130048
        %v684 = vsel %vm683, %v483, %v629
        %vm685 = vcmask 261120
        %v686 = vsel %vm685, %v684, %v633
        %vm687 = vcmask 392192
        %v688 = vsel %vm687, %v686, %v637
        %vm689 = vcmask 523264
        %v690 = vsel %vm689, %v688, %v641
        %vm691 = vcmask 654336
        %v692 = vsel %vm691, %v690, %v645
        %vm693 = vcmask 785408
        %v694 = vsel %vm693, %v692, %v649
        %vm695 = vcmask 916480
        %v696 = vsel %vm695, %v694, %v653
        %v697 = vsel %vm683, %v619, %v657
        %v698 = vsel %vm685, %v697, %v661
        %v699 = vsel %vm687, %v698, %v665
        %v700 = vsel %vm689, %v699, %v669
        %v701 = vsel %vm691, %v700, %v673
        %v702 = vsel %vm693, %v701, %v677
        %v703 = vsel %vm695, %v702, %v681
        %720 = vrot.lane.b32.xlu0 %v339, 126
        %v721 = vpop.permute.xlu0 %720
        %722 = vrot.lane.b32.xlu0 %v340, 126
        %v723 = vpop.permute.xlu0 %722
        %724 = vrot.lane.b32.xlu0 %v341, 126
        %v725 = vpop.permute.xlu0 %724
        %726 = vrot.lane.b32.xlu0 %v342, 126
        %v727 = vpop.permute.xlu0 %726
        %728 = vrot.lane.b32.xlu0 %v343, 126
        %v729 = vpop.permute.xlu0 %728
        %730 = vrot.lane.b32.xlu0 %v344, 126
        %v731 = vpop.permute.xlu0 %730
        %732 = vrot.lane.b32.xlu0 %v345, 126
        %v733 = vpop.permute.xlu0 %732
        %734 = vrot.lane.b32.xlu0 %v346, 126
        %v735 = vpop.permute.xlu0 %734
        %736 = vrot.lane.b32.xlu0 %v347, 126
        %v737 = vpop.permute.xlu0 %736
        %738 = vrot.lane.b32.xlu0 %v348, 126
        %v739 = vpop.permute.xlu0 %738
        %740 = vrot.lane.b32.xlu0 %v349, 126
        %v741 = vpop.permute.xlu0 %740
        %742 = vrot.lane.b32.xlu0 %v350, 126
        %v743 = vpop.permute.xlu0 %742
        %744 = vrot.lane.b32.xlu0 %v351, 126
        %v745 = vpop.permute.xlu0 %744
        %746 = vrot.lane.b32.xlu0 %v352, 126
        %v747 = vpop.permute.xlu0 %746
        %748 = vrot.lane.b32.xlu0 %v353, 126
        %v749 = vpop.permute.xlu0 %748
        %750 = vrot.lane.b32.xlu0 %v354, 126
        %v751 = vpop.permute.xlu0 %750
        %v768 = vcombine.low %v721, %v729
        %v769 = vcombine.high %v721, %v729
        %v771 = vunpack.c.l.s4 1983009808
        %v772 = vunpack.c.0.s8 %v771
        %v773 = vlaneseq
        %v774 = vshrl.u32 %v773, 7
        %v775 = vsub.s32 %v772, %v774
        %v776 = vrot.slane %v768, %v775
        %v778 = vunpack.c.l.s4 1983009808
        %v779 = vunpack.c.0.s8 %v778
        %v780 = vlaneseq
        %v781 = vshrl.u32 %v780, 7
        %v782 = vsub.s32 %v779, %v781
        %v783 = vrot.slane %v769, %v782
        %v784 = vcombine.low %v725, %v733
        %v785 = vcombine.high %v725, %v733
        %v787 = vunpack.c.l.s4 1983009808
        %v788 = vunpack.c.0.s8 %v787
        %v789 = vlaneseq
        %v790 = vshrl.u32 %v789, 7
        %v791 = vsub.s32 %v788, %v790
        %v792 = vrot.slane %v784, %v791
        %v794 = vunpack.c.l.s4 1983009808
        %v795 = vunpack.c.0.s8 %v794
        %v796 = vlaneseq
        %v797 = vshrl.u32 %v796, 7
        %v798 = vsub.s32 %v795, %v797
        %v799 = vrot.slane %v785, %v798
        %v800 = vcombine.low %v737, %v745
        %v801 = vcombine.high %v737, %v745
        %v803 = vunpack.c.l.s4 1983009808
        %v804 = vunpack.c.0.s8 %v803
        %v805 = vlaneseq
        %v806 = vshrl.u32 %v805, 7
        %v807 = vsub.s32 %v804, %v806
        %v808 = vrot.slane %v800, %v807
        %v810 = vunpack.c.l.s4 1983009808
        %v811 = vunpack.c.0.s8 %v810
        %v812 = vlaneseq
        %v813 = vshrl.u32 %v812, 7
        %v814 = vsub.s32 %v811, %v813
        %v815 = vrot.slane %v801, %v814
        %v816 = vcombine.low %v741, %v749
        %v817 = vcombine.high %v741, %v749
        %v819 = vunpack.c.l.s4 1983009808
        %v820 = vunpack.c.0.s8 %v819
        %v821 = vlaneseq
        %v822 = vshrl.u32 %v821, 7
        %v823 = vsub.s32 %v820, %v822
        %v824 = vrot.slane %v816, %v823
        %v826 = vunpack.c.l.s4 1983009808
        %v827 = vunpack.c.0.s8 %v826
        %v828 = vlaneseq
        %v829 = vshrl.u32 %v828, 7
        %v830 = vsub.s32 %v827, %v829
        %v831 = vrot.slane %v817, %v830
        %v832 = vcombine.low %v776, %v792
        %v833 = vcombine.high %v776, %v792
        %v835 = vunpack.c.l.s4 1934713408
        %v836 = vunpack.c.0.s8 %v835
        %v837 = vlaneseq
        %v838 = vshrl.u32 %v837, 7
        %v839 = vsub.s32 %v836, %v838
        %v840 = vrot.slane %v832, %v839
        %v842 = vunpack.c.l.s4 1934713408
        %v843 = vunpack.c.0.s8 %v842
        %v844 = vlaneseq
        %v845 = vshrl.u32 %v844, 7
        %v846 = vsub.s32 %v843, %v845
        %v847 = vrot.slane %v833, %v846
        %v848 = vcombine.low %v783, %v799
        %v849 = vcombine.high %v783, %v799
        %v851 = vunpack.c.l.s4 1934713408
        %v852 = vunpack.c.0.s8 %v851
        %v853 = vlaneseq
        %v854 = vshrl.u32 %v853, 7
        %v855 = vsub.s32 %v852, %v854
        %v856 = vrot.slane %v848, %v855
        %v858 = vunpack.c.l.s4 1934713408
        %v859 = vunpack.c.0.s8 %v858
        %v860 = vlaneseq
        %v861 = vshrl.u32 %v860, 7
        %v862 = vsub.s32 %v859, %v861
        %v863 = vrot.slane %v849, %v862
        %v864 = vcombine.low %v808, %v824
        %v865 = vcombine.high %v808, %v824
        %v867 = vunpack.c.l.s4 1934713408
        %v868 = vunpack.c.0.s8 %v867
        %v869 = vlaneseq
        %v870 = vshrl.u32 %v869, 7
        %v871 = vsub.s32 %v868, %v870
        %v872 = vrot.slane %v864, %v871
        %v874 = vunpack.c.l.s4 1934713408
        %v875 = vunpack.c.0.s8 %v874
        %v876 = vlaneseq
        %v877 = vshrl.u32 %v876, 7
        %v878 = vsub.s32 %v875, %v877
        %v879 = vrot.slane %v865, %v878
        %v880 = vcombine.low %v815, %v831
        %v881 = vcombine.high %v815, %v831
        %v883 = vunpack.c.l.s4 1934713408
        %v884 = vunpack.c.0.s8 %v883
        %v885 = vlaneseq
        %v886 = vshrl.u32 %v885, 7
        %v887 = vsub.s32 %v884, %v886
        %v888 = vrot.slane %v880, %v887
        %v890 = vunpack.c.l.s4 1934713408
        %v891 = vunpack.c.0.s8 %v890
        %v892 = vlaneseq
        %v893 = vshrl.u32 %v892, 7
        %v894 = vsub.s32 %v891, %v893
        %v895 = vrot.slane %v881, %v894
        %v896 = vcombine.low %v840, %v872
        %v897 = vcombine.high %v840, %v872
        %v898 = vcombine.low %v847, %v879
        %v899 = vcombine.high %v847, %v879
        %v900 = vcombine.low %v856, %v888
        %v901 = vcombine.high %v856, %v888
        %v902 = vcombine.low %v863, %v895
        %v903 = vcombine.high %v863, %v895
        %v904 = vcombine.low %v723, %v731
        %v905 = vcombine.high %v723, %v731
        %v907 = vunpack.c.l.s4 1983009808
        %v908 = vunpack.c.0.s8 %v907
        %v909 = vlaneseq
        %v910 = vshrl.u32 %v909, 7
        %v911 = vsub.s32 %v908, %v910
        %v912 = vrot.slane %v904, %v911
        %v914 = vunpack.c.l.s4 1983009808
        %v915 = vunpack.c.0.s8 %v914
        %v916 = vlaneseq
        %v917 = vshrl.u32 %v916, 7
        %v918 = vsub.s32 %v915, %v917
        %v919 = vrot.slane %v905, %v918
        %v920 = vcombine.low %v727, %v735
        %v921 = vcombine.high %v727, %v735
        %v923 = vunpack.c.l.s4 1983009808
        %v924 = vunpack.c.0.s8 %v923
        %v925 = vlaneseq
        %v926 = vshrl.u32 %v925, 7
        %v927 = vsub.s32 %v924, %v926
        %v928 = vrot.slane %v920, %v927
        %v930 = vunpack.c.l.s4 1983009808
        %v931 = vunpack.c.0.s8 %v930
        %v932 = vlaneseq
        %v933 = vshrl.u32 %v932, 7
        %v934 = vsub.s32 %v931, %v933
        %v935 = vrot.slane %v921, %v934
        %v936 = vcombine.low %v739, %v747
        %v937 = vcombine.high %v739, %v747
        %v939 = vunpack.c.l.s4 1983009808
        %v940 = vunpack.c.0.s8 %v939
        %v941 = vlaneseq
        %v942 = vshrl.u32 %v941, 7
        %v943 = vsub.s32 %v940, %v942
        %v944 = vrot.slane %v936, %v943
        %v946 = vunpack.c.l.s4 1983009808
        %v947 = vunpack.c.0.s8 %v946
        %v948 = vlaneseq
        %v949 = vshrl.u32 %v948, 7
        %v950 = vsub.s32 %v947, %v949
        %v951 = vrot.slane %v937, %v950
        %v952 = vcombine.low %v743, %v751
        %v953 = vcombine.high %v743, %v751
        %v955 = vunpack.c.l.s4 1983009808
        %v956 = vunpack.c.0.s8 %v955
        %v957 = vlaneseq
        %v958 = vshrl.u32 %v957, 7
        %v959 = vsub.s32 %v956, %v958
        %v960 = vrot.slane %v952, %v959
        %v962 = vunpack.c.l.s4 1983009808
        %v963 = vunpack.c.0.s8 %v962
        %v964 = vlaneseq
        %v965 = vshrl.u32 %v964, 7
        %v966 = vsub.s32 %v963, %v965
        %v967 = vrot.slane %v953, %v966
        %v968 = vcombine.low %v912, %v928
        %v969 = vcombine.high %v912, %v928
        %v971 = vunpack.c.l.s4 1934713408
        %v972 = vunpack.c.0.s8 %v971
        %v973 = vlaneseq
        %v974 = vshrl.u32 %v973, 7
        %v975 = vsub.s32 %v972, %v974
        %v976 = vrot.slane %v968, %v975
        %v978 = vunpack.c.l.s4 1934713408
        %v979 = vunpack.c.0.s8 %v978
        %v980 = vlaneseq
        %v981 = vshrl.u32 %v980, 7
        %v982 = vsub.s32 %v979, %v981
        %v983 = vrot.slane %v969, %v982
        %v984 = vcombine.low %v919, %v935
        %v985 = vcombine.high %v919, %v935
        %v987 = vunpack.c.l.s4 1934713408
        %v988 = vunpack.c.0.s8 %v987
        %v989 = vlaneseq
        %v990 = vshrl.u32 %v989, 7
        %v991 = vsub.s32 %v988, %v990
        %v992 = vrot.slane %v984, %v991
        %v994 = vunpack.c.l.s4 1934713408
        %v995 = vunpack.c.0.s8 %v994
        %v996 = vlaneseq
        %v997 = vshrl.u32 %v996, 7
        %v998 = vsub.s32 %v995, %v997
        %v999 = vrot.slane %v985, %v998
        %v1000 = vcombine.low %v944, %v960
        %v1001 = vcombine.high %v944, %v960
        %v1003 = vunpack.c.l.s4 1934713408
        %v1004 = vunpack.c.0.s8 %v1003
        %v1005 = vlaneseq
        %v1006 = vshrl.u32 %v1005, 7
        %v1007 = vsub.s32 %v1004, %v1006
        %v1008 = vrot.slane %v1000, %v1007
        %v1010 = vunpack.c.l.s4 1934713408
        %v1011 = vunpack.c.0.s8 %v1010
        %v1012 = vlaneseq
        %v1013 = vshrl.u32 %v1012, 7
        %v1014 = vsub.s32 %v1011, %v1013
        %v1015 = vrot.slane %v1001, %v1014
        %v1016 = vcombine.low %v951, %v967
        %v1017 = vcombine.high %v951, %v967
        %v1019 = vunpack.c.l.s4 1934713408
        %v1020 = vunpack.c.0.s8 %v1019
        %v1021 = vlaneseq
        %v1022 = vshrl.u32 %v1021, 7
        %v1023 = vsub.s32 %v1020, %v1022
        %v1024 = vrot.slane %v1016, %v1023
        %v1026 = vunpack.c.l.s4 1934713408
        %v1027 = vunpack.c.0.s8 %v1026
        %v1028 = vlaneseq
        %v1029 = vshrl.u32 %v1028, 7
        %v1030 = vsub.s32 %v1027, %v1029
        %v1031 = vrot.slane %v1017, %v1030
        %v1032 = vcombine.low %v976, %v1008
        %v1033 = vcombine.high %v976, %v1008
        %v1034 = vcombine.low %v983, %v1015
        %v1035 = vcombine.high %v983, %v1015
        %v1036 = vcombine.low %v992, %v1024
        %v1037 = vcombine.high %v992, %v1024
        %v1038 = vcombine.low %v999, %v1031
        %v1039 = vcombine.high %v999, %v1031
        %1041 = vrot.lane.b32.xlu0 %v897, 16
        %v1042 = vpop.permute.xlu0 %1041
        %1045 = vrot.lane.b32.xlu0 %v898, 32
        %v1046 = vpop.permute.xlu0 %1045
        %1049 = vrot.lane.b32.xlu0 %v899, 48
        %v1050 = vpop.permute.xlu0 %1049
        %1053 = vrot.lane.b32.xlu0 %v900, 64
        %v1054 = vpop.permute.xlu0 %1053
        %1057 = vrot.lane.b32.xlu0 %v901, 80
        %v1058 = vpop.permute.xlu0 %1057
        %1061 = vrot.lane.b32.xlu0 %v902, 96
        %v1062 = vpop.permute.xlu0 %1061
        %1065 = vrot.lane.b32.xlu0 %v903, 112
        %v1066 = vpop.permute.xlu0 %1065
        %1069 = vrot.lane.b32.xlu0 %v1033, 16
        %v1070 = vpop.permute.xlu0 %1069
        %1073 = vrot.lane.b32.xlu0 %v1034, 32
        %v1074 = vpop.permute.xlu0 %1073
        %1077 = vrot.lane.b32.xlu0 %v1035, 48
        %v1078 = vpop.permute.xlu0 %1077
        %1081 = vrot.lane.b32.xlu0 %v1036, 64
        %v1082 = vpop.permute.xlu0 %1081
        %1085 = vrot.lane.b32.xlu0 %v1037, 80
        %v1086 = vpop.permute.xlu0 %1085
        %1089 = vrot.lane.b32.xlu0 %v1038, 96
        %v1090 = vpop.permute.xlu0 %1089
        %1093 = vrot.lane.b32.xlu0 %v1039, 112
        %v1094 = vpop.permute.xlu0 %1093
        %v1096 = vsel %vm683, %v896, %v1042
        %v1097 = vsel %vm685, %v1096, %v1046
        %v1098 = vsel %vm687, %v1097, %v1050
        %v1099 = vsel %vm689, %v1098, %v1054
        %v1100 = vsel %vm691, %v1099, %v1058
        %v1101 = vsel %vm693, %v1100, %v1062
        %v1102 = vsel %vm695, %v1101, %v1066
        %v1103 = vsel %vm683, %v1032, %v1070
        %v1104 = vsel %vm685, %v1103, %v1074
        %v1105 = vsel %vm687, %v1104, %v1078
        %v1106 = vsel %vm689, %v1105, %v1082
        %v1107 = vsel %vm691, %v1106, %v1086
        %v1108 = vsel %vm693, %v1107, %v1090
        %v1109 = vsel %vm695, %v1108, %v1094
        %1110 = vrot.lane.b32.xlu0 %v339, 124
        %v1111 = vpop.permute.xlu0 %1110
        %1112 = vrot.lane.b32.xlu0 %v340, 124
        %v1113 = vpop.permute.xlu0 %1112
        %1114 = vrot.lane.b32.xlu0 %v341, 124
        %v1115 = vpop.permute.xlu0 %1114
        %1116 = vrot.lane.b32.xlu0 %v342, 124
        %v1117 = vpop.permute.xlu0 %1116
        %1118 = vrot.lane.b32.xlu0 %v343, 124
        %v1119 = vpop.permute.xlu0 %1118
        %1120 = vrot.lane.b32.xlu0 %v344, 124
        %v1121 = vpop.permute.xlu0 %1120
        %1122 = vrot.lane.b32.xlu0 %v345, 124
        %v1123 = vpop.permute.xlu0 %1122
        %1124 = vrot.lane.b32.xlu0 %v346, 124
        %v1125 = vpop.permute.xlu0 %1124
        %1126 = vrot.lane.b32.xlu0 %v347, 124
        %v1127 = vpop.permute.xlu0 %1126
        %1128 = vrot.lane.b32.xlu0 %v348, 124
        %v1129 = vpop.permute.xlu0 %1128
        %1130 = vrot.lane.b32.xlu0 %v349, 124
        %v1131 = vpop.permute.xlu0 %1130
        %1132 = vrot.lane.b32.xlu0 %v350, 124
        %v1133 = vpop.permute.xlu0 %1132
        %1134 = vrot.lane.b32.xlu0 %v351, 124
        %v1135 = vpop.permute.xlu0 %1134
        %1136 = vrot.lane.b32.xlu0 %v352, 124
        %v1137 = vpop.permute.xlu0 %1136
        %1138 = vrot.lane.b32.xlu0 %v353, 124
        %v1139 = vpop.permute.xlu0 %1138
        %1140 = vrot.lane.b32.xlu0 %v354, 124
        %v1141 = vpop.permute.xlu0 %1140
        %v1158 = vcombine.low %v1111, %v1119
        %v1159 = vcombine.high %v1111, %v1119
        %v1161 = vunpack.c.l.s4 1983009808
        %v1162 = vunpack.c.0.s8 %v1161
        %v1163 = vlaneseq
        %v1164 = vshrl.u32 %v1163, 7
        %v1165 = vsub.s32 %v1162, %v1164
        %v1166 = vrot.slane %v1158, %v1165
        %v1168 = vunpack.c.l.s4 1983009808
        %v1169 = vunpack.c.0.s8 %v1168
        %v1170 = vlaneseq
        %v1171 = vshrl.u32 %v1170, 7
        %v1172 = vsub.s32 %v1169, %v1171
        %v1173 = vrot.slane %v1159, %v1172
        %v1174 = vcombine.low %v1115, %v1123
        %v1175 = vcombine.high %v1115, %v1123
        %v1177 = vunpack.c.l.s4 1983009808
        %v1178 = vunpack.c.0.s8 %v1177
        %v1179 = vlaneseq
        %v1180 = vshrl.u32 %v1179, 7
        %v1181 = vsub.s32 %v1178, %v1180
        %v1182 = vrot.slane %v1174, %v1181
        %v1184 = vunpack.c.l.s4 1983009808
        %v1185 = vunpack.c.0.s8 %v1184
        %v1186 = vlaneseq
        %v1187 = vshrl.u32 %v1186, 7
        %v1188 = vsub.s32 %v1185, %v1187
        %v1189 = vrot.slane %v1175, %v1188
        %v1190 = vcombine.low %v1127, %v1135
        %v1191 = vcombine.high %v1127, %v1135
        %v1193 = vunpack.c.l.s4 1983009808
        %v1194 = vunpack.c.0.s8 %v1193
        %v1195 = vlaneseq
        %v1196 = vshrl.u32 %v1195, 7
        %v1197 = vsub.s32 %v1194, %v1196
        %v1198 = vrot.slane %v1190, %v1197
        %v1200 = vunpack.c.l.s4 1983009808
        %v1201 = vunpack.c.0.s8 %v1200
        %v1202 = vlaneseq
        %v1203 = vshrl.u32 %v1202, 7
        %v1204 = vsub.s32 %v1201, %v1203
        %v1205 = vrot.slane %v1191, %v1204
        %v1206 = vcombine.low %v1131, %v1139
        %v1207 = vcombine.high %v1131, %v1139
        %v1209 = vunpack.c.l.s4 1983009808
        %v1210 = vunpack.c.0.s8 %v1209
        %v1211 = vlaneseq
        %v1212 = vshrl.u32 %v1211, 7
        %v1213 = vsub.s32 %v1210, %v1212
        %v1214 = vrot.slane %v1206, %v1213
        %v1216 = vunpack.c.l.s4 1983009808
        %v1217 = vunpack.c.0.s8 %v1216
        %v1218 = vlaneseq
        %v1219 = vshrl.u32 %v1218, 7
        %v1220 = vsub.s32 %v1217, %v1219
        %v1221 = vrot.slane %v1207, %v1220
        %v1222 = vcombine.low %v1166, %v1182
        %v1223 = vcombine.high %v1166, %v1182
        %v1225 = vunpack.c.l.s4 1934713408
        %v1226 = vunpack.c.0.s8 %v1225
        %v1227 = vlaneseq
        %v1228 = vshrl.u32 %v1227, 7
        %v1229 = vsub.s32 %v1226, %v1228
        %v1230 = vrot.slane %v1222, %v1229
        %v1232 = vunpack.c.l.s4 1934713408
        %v1233 = vunpack.c.0.s8 %v1232
        %v1234 = vlaneseq
        %v1235 = vshrl.u32 %v1234, 7
        %v1236 = vsub.s32 %v1233, %v1235
        %v1237 = vrot.slane %v1223, %v1236
        %v1238 = vcombine.low %v1173, %v1189
        %v1239 = vcombine.high %v1173, %v1189
        %v1241 = vunpack.c.l.s4 1934713408
        %v1242 = vunpack.c.0.s8 %v1241
        %v1243 = vlaneseq
        %v1244 = vshrl.u32 %v1243, 7
        %v1245 = vsub.s32 %v1242, %v1244
        %v1246 = vrot.slane %v1238, %v1245
        %v1248 = vunpack.c.l.s4 1934713408
        %v1249 = vunpack.c.0.s8 %v1248
        %v1250 = vlaneseq
        %v1251 = vshrl.u32 %v1250, 7
        %v1252 = vsub.s32 %v1249, %v1251
        %v1253 = vrot.slane %v1239, %v1252
        %v1254 = vcombine.low %v1198, %v1214
        %v1255 = vcombine.high %v1198, %v1214
        %v1257 = vunpack.c.l.s4 1934713408
        %v1258 = vunpack.c.0.s8 %v1257
        %v1259 = vlaneseq
        %v1260 = vshrl.u32 %v1259, 7
        %v1261 = vsub.s32 %v1258, %v1260
        %v1262 = vrot.slane %v1254, %v1261
        %v1264 = vunpack.c.l.s4 1934713408
        %v1265 = vunpack.c.0.s8 %v1264
        %v1266 = vlaneseq
        %v1267 = vshrl.u32 %v1266, 7
        %v1268 = vsub.s32 %v1265, %v1267
        %v1269 = vrot.slane %v1255, %v1268
        %v1270 = vcombine.low %v1205, %v1221
        %v1271 = vcombine.high %v1205, %v1221
        %v1273 = vunpack.c.l.s4 1934713408
        %v1274 = vunpack.c.0.s8 %v1273
        %v1275 = vlaneseq
        %v1276 = vshrl.u32 %v1275, 7
        %v1277 = vsub.s32 %v1274, %v1276
        %v1278 = vrot.slane %v1270, %v1277
        %v1280 = vunpack.c.l.s4 1934713408
        %v1281 = vunpack.c.0.s8 %v1280
        %v1282 = vlaneseq
        %v1283 = vshrl.u32 %v1282, 7
        %v1284 = vsub.s32 %v1281, %v1283
        %v1285 = vrot.slane %v1271, %v1284
        %v1286 = vcombine.low %v1230, %v1262
        %v1287 = vcombine.high %v1230, %v1262
        %v1288 = vcombine.low %v1237, %v1269
        %v1289 = vcombine.high %v1237, %v1269
        %v1290 = vcombine.low %v1246, %v1278
        %v1291 = vcombine.high %v1246, %v1278
        %v1292 = vcombine.low %v1253, %v1285
        %v1293 = vcombine.high %v1253, %v1285
        %v1294 = vcombine.low %v1113, %v1121
        %v1295 = vcombine.high %v1113, %v1121
        %v1297 = vunpack.c.l.s4 1983009808
        %v1298 = vunpack.c.0.s8 %v1297
        %v1299 = vlaneseq
        %v1300 = vshrl.u32 %v1299, 7
        %v1301 = vsub.s32 %v1298, %v1300
        %v1302 = vrot.slane %v1294, %v1301
        %v1304 = vunpack.c.l.s4 1983009808
        %v1305 = vunpack.c.0.s8 %v1304
        %v1306 = vlaneseq
        %v1307 = vshrl.u32 %v1306, 7
        %v1308 = vsub.s32 %v1305, %v1307
        %v1309 = vrot.slane %v1295, %v1308
        %v1310 = vcombine.low %v1117, %v1125
        %v1311 = vcombine.high %v1117, %v1125
        %v1313 = vunpack.c.l.s4 1983009808
        %v1314 = vunpack.c.0.s8 %v1313
        %v1315 = vlaneseq
        %v1316 = vshrl.u32 %v1315, 7
        %v1317 = vsub.s32 %v1314, %v1316
        %v1318 = vrot.slane %v1310, %v1317
        %v1320 = vunpack.c.l.s4 1983009808
        %v1321 = vunpack.c.0.s8 %v1320
        %v1322 = vlaneseq
        %v1323 = vshrl.u32 %v1322, 7
        %v1324 = vsub.s32 %v1321, %v1323
        %v1325 = vrot.slane %v1311, %v1324
        %v1326 = vcombine.low %v1129, %v1137
        %v1327 = vcombine.high %v1129, %v1137
        %v1329 = vunpack.c.l.s4 1983009808
        %v1330 = vunpack.c.0.s8 %v1329
        %v1331 = vlaneseq
        %v1332 = vshrl.u32 %v1331, 7
        %v1333 = vsub.s32 %v1330, %v1332
        %v1334 = vrot.slane %v1326, %v1333
        %v1336 = vunpack.c.l.s4 1983009808
        %v1337 = vunpack.c.0.s8 %v1336
        %v1338 = vlaneseq
        %v1339 = vshrl.u32 %v1338, 7
        %v1340 = vsub.s32 %v1337, %v1339
        %v1341 = vrot.slane %v1327, %v1340
        %v1342 = vcombine.low %v1133, %v1141
        %v1343 = vcombine.high %v1133, %v1141
        %v1345 = vunpack.c.l.s4 1983009808
        %v1346 = vunpack.c.0.s8 %v1345
        %v1347 = vlaneseq
        %v1348 = vshrl.u32 %v1347, 7
        %v1349 = vsub.s32 %v1346, %v1348
        %v1350 = vrot.slane %v1342, %v1349
        %v1352 = vunpack.c.l.s4 1983009808
        %v1353 = vunpack.c.0.s8 %v1352
        %v1354 = vlaneseq
        %v1355 = vshrl.u32 %v1354, 7
        %v1356 = vsub.s32 %v1353, %v1355
        %v1357 = vrot.slane %v1343, %v1356
        %v1358 = vcombine.low %v1302, %v1318
        %v1359 = vcombine.high %v1302, %v1318
        %v1361 = vunpack.c.l.s4 1934713408
        %v1362 = vunpack.c.0.s8 %v1361
        %v1363 = vlaneseq
        %v1364 = vshrl.u32 %v1363, 7
        %v1365 = vsub.s32 %v1362, %v1364
        %v1366 = vrot.slane %v1358, %v1365
        %v1368 = vunpack.c.l.s4 1934713408
        %v1369 = vunpack.c.0.s8 %v1368
        %v1370 = vlaneseq
        %v1371 = vshrl.u32 %v1370, 7
        %v1372 = vsub.s32 %v1369, %v1371
        %v1373 = vrot.slane %v1359, %v1372
        %v1374 = vcombine.low %v1309, %v1325
        %v1375 = vcombine.high %v1309, %v1325
        %v1377 = vunpack.c.l.s4 1934713408
        %v1378 = vunpack.c.0.s8 %v1377
        %v1379 = vlaneseq
        %v1380 = vshrl.u32 %v1379, 7
        %v1381 = vsub.s32 %v1378, %v1380
        %v1382 = vrot.slane %v1374, %v1381
        %v1384 = vunpack.c.l.s4 1934713408
        %v1385 = vunpack.c.0.s8 %v1384
        %v1386 = vlaneseq
        %v1387 = vshrl.u32 %v1386, 7
        %v1388 = vsub.s32 %v1385, %v1387
        %v1389 = vrot.slane %v1375, %v1388
        %v1390 = vcombine.low %v1334, %v1350
        %v1391 = vcombine.high %v1334, %v1350
        %v1393 = vunpack.c.l.s4 1934713408
        %v1394 = vunpack.c.0.s8 %v1393
        %v1395 = vlaneseq
        %v1396 = vshrl.u32 %v1395, 7
        %v1397 = vsub.s32 %v1394, %v1396
        %v1398 = vrot.slane %v1390, %v1397
        %v1400 = vunpack.c.l.s4 1934713408
        %v1401 = vunpack.c.0.s8 %v1400
        %v1402 = vlaneseq
        %v1403 = vshrl.u32 %v1402, 7
        %v1404 = vsub.s32 %v1401, %v1403
        %v1405 = vrot.slane %v1391, %v1404
        %v1406 = vcombine.low %v1341, %v1357
        %v1407 = vcombine.high %v1341, %v1357
        %v1409 = vunpack.c.l.s4 1934713408
        %v1410 = vunpack.c.0.s8 %v1409
        %v1411 = vlaneseq
        %v1412 = vshrl.u32 %v1411, 7
        %v1413 = vsub.s32 %v1410, %v1412
        %v1414 = vrot.slane %v1406, %v1413
        %v1416 = vunpack.c.l.s4 1934713408
        %v1417 = vunpack.c.0.s8 %v1416
        %v1418 = vlaneseq
        %v1419 = vshrl.u32 %v1418, 7
        %v1420 = vsub.s32 %v1417, %v1419
        %v1421 = vrot.slane %v1407, %v1420
        %v1422 = vcombine.low %v1366, %v1398
        %v1423 = vcombine.high %v1366, %v1398
        %v1424 = vcombine.low %v1373, %v1405
        %v1425 = vcombine.high %v1373, %v1405
        %v1426 = vcombine.low %v1382, %v1414
        %v1427 = vcombine.high %v1382, %v1414
        %v1428 = vcombine.low %v1389, %v1421
        %v1429 = vcombine.high %v1389, %v1421
        %1431 = vrot.lane.b32.xlu0 %v1287, 16
        %v1432 = vpop.permute.xlu0 %1431
        %1435 = vrot.lane.b32.xlu0 %v1288, 32
        %v1436 = vpop.permute.xlu0 %1435
        %1439 = vrot.lane.b32.xlu0 %v1289, 48
        %v1440 = vpop.permute.xlu0 %1439
        %1443 = vrot.lane.b32.xlu0 %v1290, 64
        %v1444 = vpop.permute.xlu0 %1443
        %1447 = vrot.lane.b32.xlu0 %v1291, 80
        %v1448 = vpop.permute.xlu0 %1447
        %1451 = vrot.lane.b32.xlu0 %v1292, 96
        %v1452 = vpop.permute.xlu0 %1451
        %1455 = vrot.lane.b32.xlu0 %v1293, 112
        %v1456 = vpop.permute.xlu0 %1455
        %1459 = vrot.lane.b32.xlu0 %v1423, 16
        %v1460 = vpop.permute.xlu0 %1459
        %1463 = vrot.lane.b32.xlu0 %v1424, 32
        %v1464 = vpop.permute.xlu0 %1463
        %1467 = vrot.lane.b32.xlu0 %v1425, 48
        %v1468 = vpop.permute.xlu0 %1467
        %1471 = vrot.lane.b32.xlu0 %v1426, 64
        %v1472 = vpop.permute.xlu0 %1471
        %1475 = vrot.lane.b32.xlu0 %v1427, 80
        %v1476 = vpop.permute.xlu0 %1475
        %1479 = vrot.lane.b32.xlu0 %v1428, 96
        %v1480 = vpop.permute.xlu0 %1479
        %1483 = vrot.lane.b32.xlu0 %v1429, 112
        %v1484 = vpop.permute.xlu0 %1483
        %v1486 = vsel %vm683, %v1286, %v1432
        %v1487 = vsel %vm685, %v1486, %v1436
        %v1488 = vsel %vm687, %v1487, %v1440
        %v1489 = vsel %vm689, %v1488, %v1444
        %v1490 = vsel %vm691, %v1489, %v1448
        %v1491 = vsel %vm693, %v1490, %v1452
        %v1492 = vsel %vm695, %v1491, %v1456
        %v1493 = vsel %vm683, %v1422, %v1460
        %v1494 = vsel %vm685, %v1493, %v1464
        %v1495 = vsel %vm687, %v1494, %v1468
        %v1496 = vsel %vm689, %v1495, %v1472
        %v1497 = vsel %vm691, %v1496, %v1476
        %v1498 = vsel %vm693, %v1497, %v1480
        %v1499 = vsel %vm695, %v1498, %v1484
        %v1500 = vld [vmem:[#allocation2 + $0x2] sm:$0xff]
        %v1501 = vld [vmem:[#allocation2 + $0xa] sm:$0xff]
        %v1502 = vld [vmem:[#allocation2 + $0x1a] sm:$0xff]
        %v1503 = vld [vmem:[#allocation2 + $0x22] sm:$0xff]
        %v1504 = vld [vmem:[#allocation2 + $0x32] sm:$0xff]
        %v1505 = vld [vmem:[#allocation2 + $0x3a] sm:$0xff]
        %v1506 = vld [vmem:[#allocation2 + $0x4a] sm:$0xff]
        %v1507 = vld [vmem:[#allocation2 + $0x52] sm:$0xff]
        %v1508 = vld [vmem:[#allocation2 + $0x62] sm:$0xff]
        %v1509 = vld [vmem:[#allocation2 + $0x6a] sm:$0xff]
        %v1510 = vld [vmem:[#allocation2 + $0x7a] sm:$0xff]
        %v1511 = vld [vmem:[#allocation2 + $0x82] sm:$0xff]
        %v1512 = vld [vmem:[#allocation2 + $0x92] sm:$0xff]
        %v1513 = vld [vmem:[#allocation2 + $0x9a] sm:$0xff]
        %v1514 = vld [vmem:[#allocation2 + $0xaa] sm:$0xff]
        %v1515 = vld [vmem:[#allocation2 + $0xb2] sm:$0xff]
        %v1516 = vcombine.low %v1500, %v1504
        %v1517 = vcombine.high %v1500, %v1504
        %v1519 = vunpack.c.l.s4 1983009808
        %v1520 = vunpack.c.0.s8 %v1519
        %v1521 = vlaneseq
        %v1522 = vshrl.u32 %v1521, 7
        %v1523 = vsub.s32 %v1520, %v1522
        %v1524 = vrot.slane %v1516, %v1523
        %v1526 = vunpack.c.l.s4 1983009808
        %v1527 = vunpack.c.0.s8 %v1526
        %v1528 = vlaneseq
        %v1529 = vshrl.u32 %v1528, 7
        %v1530 = vsub.s32 %v1527, %v1529
        %v1531 = vrot.slane %v1517, %v1530
        %v1532 = vcombine.low %v1502, %v1506
        %v1533 = vcombine.high %v1502, %v1506
        %v1535 = vunpack.c.l.s4 1983009808
        %v1536 = vunpack.c.0.s8 %v1535
        %v1537 = vlaneseq
        %v1538 = vshrl.u32 %v1537, 7
        %v1539 = vsub.s32 %v1536, %v1538
        %v1540 = vrot.slane %v1532, %v1539
        %v1542 = vunpack.c.l.s4 1983009808
        %v1543 = vunpack.c.0.s8 %v1542
        %v1544 = vlaneseq
        %v1545 = vshrl.u32 %v1544, 7
        %v1546 = vsub.s32 %v1543, %v1545
        %v1547 = vrot.slane %v1533, %v1546
        %v1548 = vcombine.low %v1508, %v1512
        %v1549 = vcombine.high %v1508, %v1512
        %v1551 = vunpack.c.l.s4 1983009808
        %v1552 = vunpack.c.0.s8 %v1551
        %v1553 = vlaneseq
        %v1554 = vshrl.u32 %v1553, 7
        %v1555 = vsub.s32 %v1552, %v1554
        %v1556 = vrot.slane %v1548, %v1555
        %v1558 = vunpack.c.l.s4 1983009808
        %v1559 = vunpack.c.0.s8 %v1558
        %v1560 = vlaneseq
        %v1561 = vshrl.u32 %v1560, 7
        %v1562 = vsub.s32 %v1559, %v1561
        %v1563 = vrot.slane %v1549, %v1562
        %v1564 = vcombine.low %v1510, %v1514
        %v1565 = vcombine.high %v1510, %v1514
        %v1567 = vunpack.c.l.s4 1983009808
        %v1568 = vunpack.c.0.s8 %v1567
        %v1569 = vlaneseq
        %v1570 = vshrl.u32 %v1569, 7
        %v1571 = vsub.s32 %v1568, %v1570
        %v1572 = vrot.slane %v1564, %v1571
        %v1574 = vunpack.c.l.s4 1983009808
        %v1575 = vunpack.c.0.s8 %v1574
        %v1576 = vlaneseq
        %v1577 = vshrl.u32 %v1576, 7
        %v1578 = vsub.s32 %v1575, %v1577
        %v1579 = vrot.slane %v1565, %v1578
        %v1580 = vcombine.low %v1524, %v1540
        %v1581 = vcombine.high %v1524, %v1540
        %v1583 = vunpack.c.l.s4 1934713408
        %v1584 = vunpack.c.0.s8 %v1583
        %v1585 = vlaneseq
        %v1586 = vshrl.u32 %v1585, 7
        %v1587 = vsub.s32 %v1584, %v1586
        %v1588 = vrot.slane %v1580, %v1587
        %v1590 = vunpack.c.l.s4 1934713408
        %v1591 = vunpack.c.0.s8 %v1590
        %v1592 = vlaneseq
        %v1593 = vshrl.u32 %v1592, 7
        %v1594 = vsub.s32 %v1591, %v1593
        %v1595 = vrot.slane %v1581, %v1594
        %v1596 = vcombine.low %v1531, %v1547
        %v1597 = vcombine.high %v1531, %v1547
        %v1599 = vunpack.c.l.s4 1934713408
        %v1600 = vunpack.c.0.s8 %v1599
        %v1601 = vlaneseq
        %v1602 = vshrl.u32 %v1601, 7
        %v1603 = vsub.s32 %v1600, %v1602
        %v1604 = vrot.slane %v1596, %v1603
        %v1606 = vunpack.c.l.s4 1934713408
        %v1607 = vunpack.c.0.s8 %v1606
        %v1608 = vlaneseq
        %v1609 = vshrl.u32 %v1608, 7
        %v1610 = vsub.s32 %v1607, %v1609
        %v1611 = vrot.slane %v1597, %v1610
        %v1612 = vcombine.low %v1556, %v1572
        %v1613 = vcombine.high %v1556, %v1572
        %v1615 = vunpack.c.l.s4 1934713408
        %v1616 = vunpack.c.0.s8 %v1615
        %v1617 = vlaneseq
        %v1618 = vshrl.u32 %v1617, 7
        %v1619 = vsub.s32 %v1616, %v1618
        %v1620 = vrot.slane %v1612, %v1619
        %v1622 = vunpack.c.l.s4 1934713408
        %v1623 = vunpack.c.0.s8 %v1622
        %v1624 = vlaneseq
        %v1625 = vshrl.u32 %v1624, 7
        %v1626 = vsub.s32 %v1623, %v1625
        %v1627 = vrot.slane %v1613, %v1626
        %v1628 = vcombine.low %v1563, %v1579
        %v1629 = vcombine.high %v1563, %v1579
        %v1631 = vunpack.c.l.s4 1934713408
        %v1632 = vunpack.c.0.s8 %v1631
        %v1633 = vlaneseq
        %v1634 = vshrl.u32 %v1633, 7
        %v1635 = vsub.s32 %v1632, %v1634
        %v1636 = vrot.slane %v1628, %v1635
        %v1638 = vunpack.c.l.s4 1934713408
        %v1639 = vunpack.c.0.s8 %v1638
        %v1640 = vlaneseq
        %v1641 = vshrl.u32 %v1640, 7
        %v1642 = vsub.s32 %v1639, %v1641
        %v1643 = vrot.slane %v1629, %v1642
        %v1644 = vcombine.low %v1588, %v1620
        %v1645 = vcombine.high %v1588, %v1620
        %v1646 = vcombine.low %v1595, %v1627
        %v1647 = vcombine.high %v1595, %v1627
        %v1648 = vcombine.low %v1604, %v1636
        %v1649 = vcombine.high %v1604, %v1636
        %v1650 = vcombine.low %v1611, %v1643
        %v1651 = vcombine.high %v1611, %v1643
        %v1652 = vcombine.low %v1501, %v1505
        %v1653 = vcombine.high %v1501, %v1505
        %v1655 = vunpack.c.l.s4 1983009808
        %v1656 = vunpack.c.0.s8 %v1655
        %v1657 = vlaneseq
        %v1658 = vshrl.u32 %v1657, 7
        %v1659 = vsub.s32 %v1656, %v1658
        %v1660 = vrot.slane %v1652, %v1659
        %v1662 = vunpack.c.l.s4 1983009808
        %v1663 = vunpack.c.0.s8 %v1662
        %v1664 = vlaneseq
        %v1665 = vshrl.u32 %v1664, 7
        %v1666 = vsub.s32 %v1663, %v1665
        %v1667 = vrot.slane %v1653, %v1666
        %v1668 = vcombine.low %v1503, %v1507
        %v1669 = vcombine.high %v1503, %v1507
        %v1671 = vunpack.c.l.s4 1983009808
        %v1672 = vunpack.c.0.s8 %v1671
        %v1673 = vlaneseq
        %v1674 = vshrl.u32 %v1673, 7
        %v1675 = vsub.s32 %v1672, %v1674
        %v1676 = vrot.slane %v1668, %v1675
        %v1678 = vunpack.c.l.s4 1983009808
        %v1679 = vunpack.c.0.s8 %v1678
        %v1680 = vlaneseq
        %v1681 = vshrl.u32 %v1680, 7
        %v1682 = vsub.s32 %v1679, %v1681
        %v1683 = vrot.slane %v1669, %v1682
        %v1684 = vcombine.low %v1509, %v1513
        %v1685 = vcombine.high %v1509, %v1513
        %v1687 = vunpack.c.l.s4 1983009808
        %v1688 = vunpack.c.0.s8 %v1687
        %v1689 = vlaneseq
        %v1690 = vshrl.u32 %v1689, 7
        %v1691 = vsub.s32 %v1688, %v1690
        %v1692 = vrot.slane %v1684, %v1691
        %v1694 = vunpack.c.l.s4 1983009808
        %v1695 = vunpack.c.0.s8 %v1694
        %v1696 = vlaneseq
        %v1697 = vshrl.u32 %v1696, 7
        %v1698 = vsub.s32 %v1695, %v1697
        %v1699 = vrot.slane %v1685, %v1698
        %v1700 = vcombine.low %v1511, %v1515
        %v1701 = vcombine.high %v1511, %v1515
        %v1703 = vunpack.c.l.s4 1983009808
        %v1704 = vunpack.c.0.s8 %v1703
        %v1705 = vlaneseq
        %v1706 = vshrl.u32 %v1705, 7
        %v1707 = vsub.s32 %v1704, %v1706
        %v1708 = vrot.slane %v1700, %v1707
        %v1710 = vunpack.c.l.s4 1983009808
        %v1711 = vunpack.c.0.s8 %v1710
        %v1712 = vlaneseq
        %v1713 = vshrl.u32 %v1712, 7
        %v1714 = vsub.s32 %v1711, %v1713
        %v1715 = vrot.slane %v1701, %v1714
        %v1716 = vcombine.low %v1660, %v1676
        %v1717 = vcombine.high %v1660, %v1676
        %v1719 = vunpack.c.l.s4 1934713408
        %v1720 = vunpack.c.0.s8 %v1719
        %v1721 = vlaneseq
        %v1722 = vshrl.u32 %v1721, 7
        %v1723 = vsub.s32 %v1720, %v1722
        %v1724 = vrot.slane %v1716, %v1723
        %v1726 = vunpack.c.l.s4 1934713408
        %v1727 = vunpack.c.0.s8 %v1726
        %v1728 = vlaneseq
        %v1729 = vshrl.u32 %v1728, 7
        %v1730 = vsub.s32 %v1727, %v1729
        %v1731 = vrot.slane %v1717, %v1730
        %v1732 = vcombine.low %v1667, %v1683
        %v1733 = vcombine.high %v1667, %v1683
        %v1735 = vunpack.c.l.s4 1934713408
        %v1736 = vunpack.c.0.s8 %v1735
        %v1737 = vlaneseq
        %v1738 = vshrl.u32 %v1737, 7
        %v1739 = vsub.s32 %v1736, %v1738
        %v1740 = vrot.slane %v1732, %v1739
        %v1742 = vunpack.c.l.s4 1934713408
        %v1743 = vunpack.c.0.s8 %v1742
        %v1744 = vlaneseq
        %v1745 = vshrl.u32 %v1744, 7
        %v1746 = vsub.s32 %v1743, %v1745
        %v1747 = vrot.slane %v1733, %v1746
        %v1748 = vcombine.low %v1692, %v1708
        %v1749 = vcombine.high %v1692, %v1708
        %v1751 = vunpack.c.l.s4 1934713408
        %v1752 = vunpack.c.0.s8 %v1751
        %v1753 = vlaneseq
        %v1754 = vshrl.u32 %v1753, 7
        %v1755 = vsub.s32 %v1752, %v1754
        %v1756 = vrot.slane %v1748, %v1755
        %v1758 = vunpack.c.l.s4 1934713408
        %v1759 = vunpack.c.0.s8 %v1758
        %v1760 = vlaneseq
        %v1761 = vshrl.u32 %v1760, 7
        %v1762 = vsub.s32 %v1759, %v1761
        %v1763 = vrot.slane %v1749, %v1762
        %v1764 = vcombine.low %v1699, %v1715
        %v1765 = vcombine.high %v1699, %v1715
        %v1767 = vunpack.c.l.s4 1934713408
        %v1768 = vunpack.c.0.s8 %v1767
        %v1769 = vlaneseq
        %v1770 = vshrl.u32 %v1769, 7
        %v1771 = vsub.s32 %v1768, %v1770
        %v1772 = vrot.slane %v1764, %v1771
        %v1774 = vunpack.c.l.s4 1934713408
        %v1775 = vunpack.c.0.s8 %v1774
        %v1776 = vlaneseq
        %v1777 = vshrl.u32 %v1776, 7
        %v1778 = vsub.s32 %v1775, %v1777
        %v1779 = vrot.slane %v1765, %v1778
        %v1780 = vcombine.low %v1724, %v1756
        %v1781 = vcombine.high %v1724, %v1756
        %v1782 = vcombine.low %v1731, %v1763
        %v1783 = vcombine.high %v1731, %v1763
        %v1784 = vcombine.low %v1740, %v1772
        %v1785 = vcombine.high %v1740, %v1772
        %v1786 = vcombine.low %v1747, %v1779
        %v1787 = vcombine.high %v1747, %v1779
        %1789 = vrot.lane.b32.xlu0 %v1645, 16
        %v1790 = vpop.permute.xlu0 %1789
        %1793 = vrot.lane.b32.xlu0 %v1646, 32
        %v1794 = vpop.permute.xlu0 %1793
        %1797 = vrot.lane.b32.xlu0 %v1647, 48
        %v1798 = vpop.permute.xlu0 %1797
        %1801 = vrot.lane.b32.xlu0 %v1648, 64
        %v1802 = vpop.permute.xlu0 %1801
        %1805 = vrot.lane.b32.xlu0 %v1649, 80
        %v1806 = vpop.permute.xlu0 %1805
        %1809 = vrot.lane.b32.xlu0 %v1650, 96
        %v1810 = vpop.permute.xlu0 %1809
        %1813 = vrot.lane.b32.xlu0 %v1651, 112
        %v1814 = vpop.permute.xlu0 %1813
        %1817 = vrot.lane.b32.xlu0 %v1781, 16
        %v1818 = vpop.permute.xlu0 %1817
        %1821 = vrot.lane.b32.xlu0 %v1782, 32
        %v1822 = vpop.permute.xlu0 %1821
        %1825 = vrot.lane.b32.xlu0 %v1783, 48
        %v1826 = vpop.permute.xlu0 %1825
        %1829 = vrot.lane.b32.xlu0 %v1784, 64
        %v1830 = vpop.permute.xlu0 %1829
        %1833 = vrot.lane.b32.xlu0 %v1785, 80
        %v1834 = vpop.permute.xlu0 %1833
        %1837 = vrot.lane.b32.xlu0 %v1786, 96
        %v1838 = vpop.permute.xlu0 %1837
        %1841 = vrot.lane.b32.xlu0 %v1787, 112
        %v1842 = vpop.permute.xlu0 %1841
        %v1844 = vsel %vm683, %v1644, %v1790
        %v1845 = vsel %vm685, %v1844, %v1794
        %v1846 = vsel %vm687, %v1845, %v1798
        %v1847 = vsel %vm689, %v1846, %v1802
        %v1848 = vsel %vm691, %v1847, %v1806
        %v1849 = vsel %vm693, %v1848, %v1810
        %v1850 = vsel %vm695, %v1849, %v1814
        %v1851 = vsel %vm683, %v1780, %v1818
        %v1852 = vsel %vm685, %v1851, %v1822
        %v1853 = vsel %vm687, %v1852, %v1826
        %v1854 = vsel %vm689, %v1853, %v1830
        %v1855 = vsel %vm691, %v1854, %v1834
        %v1856 = vsel %vm693, %v1855, %v1838
        %v1857 = vsel %vm695, %v1856, %v1842
        %1874 = vrot.lane.b32.xlu0 %v1500, 126
        %v1875 = vpop.permute.xlu0 %1874
        %1876 = vrot.lane.b32.xlu0 %v1501, 126
        %v1877 = vpop.permute.xlu0 %1876
        %1878 = vrot.lane.b32.xlu0 %v1502, 126
        %v1879 = vpop.permute.xlu0 %1878
        %1880 = vrot.lane.b32.xlu0 %v1503, 126
        %v1881 = vpop.permute.xlu0 %1880
        %1882 = vrot.lane.b32.xlu0 %v1504, 126
        %v1883 = vpop.permute.xlu0 %1882
        %1884 = vrot.lane.b32.xlu0 %v1505, 126
        %v1885 = vpop.permute.xlu0 %1884
        %1886 = vrot.lane.b32.xlu0 %v1506, 126
        %v1887 = vpop.permute.xlu0 %1886
        %1888 = vrot.lane.b32.xlu0 %v1507, 126
        %v1889 = vpop.permute.xlu0 %1888
        %1890 = vrot.lane.b32.xlu0 %v1508, 126
        %v1891 = vpop.permute.xlu0 %1890
        %1892 = vrot.lane.b32.xlu0 %v1509, 126
        %v1893 = vpop.permute.xlu0 %1892
        %1894 = vrot.lane.b32.xlu0 %v1510, 126
        %v1895 = vpop.permute.xlu0 %1894
        %1896 = vrot.lane.b32.xlu0 %v1511, 126
        %v1897 = vpop.permute.xlu0 %1896
        %1898 = vrot.lane.b32.xlu0 %v1512, 126
        %v1899 = vpop.permute.xlu0 %1898
        %1900 = vrot.lane.b32.xlu0 %v1513, 126
        %v1901 = vpop.permute.xlu0 %1900
        %1902 = vrot.lane.b32.xlu0 %v1514, 126
        %v1903 = vpop.permute.xlu0 %1902
        %1904 = vrot.lane.b32.xlu0 %v1515, 126
        %v1905 = vpop.permute.xlu0 %1904
        %v1922 = vcombine.low %v1875, %v1883
        %v1923 = vcombine.high %v1875, %v1883
        %v1925 = vunpack.c.l.s4 1983009808
        %v1926 = vunpack.c.0.s8 %v1925
        %v1927 = vlaneseq
        %v1928 = vshrl.u32 %v1927, 7
        %v1929 = vsub.s32 %v1926, %v1928
        %v1930 = vrot.slane %v1922, %v1929
        %v1932 = vunpack.c.l.s4 1983009808
        %v1933 = vunpack.c.0.s8 %v1932
        %v1934 = vlaneseq
        %v1935 = vshrl.u32 %v1934, 7
        %v1936 = vsub.s32 %v1933, %v1935
        %v1937 = vrot.slane %v1923, %v1936
        %v1938 = vcombine.low %v1879, %v1887
        %v1939 = vcombine.high %v1879, %v1887
        %v1941 = vunpack.c.l.s4 1983009808
        %v1942 = vunpack.c.0.s8 %v1941
        %v1943 = vlaneseq
        %v1944 = vshrl.u32 %v1943, 7
        %v1945 = vsub.s32 %v1942, %v1944
        %v1946 = vrot.slane %v1938, %v1945
        %v1948 = vunpack.c.l.s4 1983009808
        %v1949 = vunpack.c.0.s8 %v1948
        %v1950 = vlaneseq
        %v1951 = vshrl.u32 %v1950, 7
        %v1952 = vsub.s32 %v1949, %v1951
        %v1953 = vrot.slane %v1939, %v1952
        %v1954 = vcombine.low %v1891, %v1899
        %v1955 = vcombine.high %v1891, %v1899
        %v1957 = vunpack.c.l.s4 1983009808
        %v1958 = vunpack.c.0.s8 %v1957
        %v1959 = vlaneseq
        %v1960 = vshrl.u32 %v1959, 7
        %v1961 = vsub.s32 %v1958, %v1960
        %v1962 = vrot.slane %v1954, %v1961
        %v1964 = vunpack.c.l.s4 1983009808
        %v1965 = vunpack.c.0.s8 %v1964
        %v1966 = vlaneseq
        %v1967 = vshrl.u32 %v1966, 7
        %v1968 = vsub.s32 %v1965, %v1967
        %v1969 = vrot.slane %v1955, %v1968
        %v1970 = vcombine.low %v1895, %v1903
        %v1971 = vcombine.high %v1895, %v1903
        %v1973 = vunpack.c.l.s4 1983009808
        %v1974 = vunpack.c.0.s8 %v1973
        %v1975 = vlaneseq
        %v1976 = vshrl.u32 %v1975, 7
        %v1977 = vsub.s32 %v1974, %v1976
        %v1978 = vrot.slane %v1970, %v1977
        %v1980 = vunpack.c.l.s4 1983009808
        %v1981 = vunpack.c.0.s8 %v1980
        %v1982 = vlaneseq
        %v1983 = vshrl.u32 %v1982, 7
        %v1984 = vsub.s32 %v1981, %v1983
        %v1985 = vrot.slane %v1971, %v1984
        %v1986 = vcombine.low %v1930, %v1946
        %v1987 = vcombine.high %v1930, %v1946
        %v1989 = vunpack.c.l.s4 1934713408
        %v1990 = vunpack.c.0.s8 %v1989
        %v1991 = vlaneseq
        %v1992 = vshrl.u32 %v1991, 7
        %v1993 = vsub.s32 %v1990, %v1992
        %v1994 = vrot.slane %v1986, %v1993
        %v1996 = vunpack.c.l.s4 1934713408
        %v1997 = vunpack.c.0.s8 %v1996
        %v1998 = vlaneseq
        %v1999 = vshrl.u32 %v1998, 7
        %v2000 = vsub.s32 %v1997, %v1999
        %v2001 = vrot.slane %v1987, %v2000
        %v2002 = vcombine.low %v1937, %v1953
        %v2003 = vcombine.high %v1937, %v1953
        %v2005 = vunpack.c.l.s4 1934713408
        %v2006 = vunpack.c.0.s8 %v2005
        %v2007 = vlaneseq
        %v2008 = vshrl.u32 %v2007, 7
        %v2009 = vsub.s32 %v2006, %v2008
        %v2010 = vrot.slane %v2002, %v2009
        %v2012 = vunpack.c.l.s4 1934713408
        %v2013 = vunpack.c.0.s8 %v2012
        %v2014 = vlaneseq
        %v2015 = vshrl.u32 %v2014, 7
        %v2016 = vsub.s32 %v2013, %v2015
        %v2017 = vrot.slane %v2003, %v2016
        %v2018 = vcombine.low %v1962, %v1978
        %v2019 = vcombine.high %v1962, %v1978
        %v2021 = vunpack.c.l.s4 1934713408
        %v2022 = vunpack.c.0.s8 %v2021
        %v2023 = vlaneseq
        %v2024 = vshrl.u32 %v2023, 7
        %v2025 = vsub.s32 %v2022, %v2024
        %v2026 = vrot.slane %v2018, %v2025
        %v2028 = vunpack.c.l.s4 1934713408
        %v2029 = vunpack.c.0.s8 %v2028
        %v2030 = vlaneseq
        %v2031 = vshrl.u32 %v2030, 7
        %v2032 = vsub.s32 %v2029, %v2031
        %v2033 = vrot.slane %v2019, %v2032
        %v2034 = vcombine.low %v1969, %v1985
        %v2035 = vcombine.high %v1969, %v1985
        %v2037 = vunpack.c.l.s4 1934713408
        %v2038 = vunpack.c.0.s8 %v2037
        %v2039 = vlaneseq
        %v2040 = vshrl.u32 %v2039, 7
        %v2041 = vsub.s32 %v2038, %v2040
        %v2042 = vrot.slane %v2034, %v2041
        %v2044 = vunpack.c.l.s4 1934713408
        %v2045 = vunpack.c.0.s8 %v2044
        %v2046 = vlaneseq
        %v2047 = vshrl.u32 %v2046, 7
        %v2048 = vsub.s32 %v2045, %v2047
        %v2049 = vrot.slane %v2035, %v2048
        %v2050 = vcombine.low %v1994, %v2026
        %v2051 = vcombine.high %v1994, %v2026
        %v2052 = vcombine.low %v2001, %v2033
        %v2053 = vcombine.high %v2001, %v2033
        %v2054 = vcombine.low %v2010, %v2042
        %v2055 = vcombine.high %v2010, %v2042
        %v2056 = vcombine.low %v2017, %v2049
        %v2057 = vcombine.high %v2017, %v2049
        %v2058 = vcombine.low %v1877, %v1885
        %v2059 = vcombine.high %v1877, %v1885
        %v2061 = vunpack.c.l.s4 1983009808
        %v2062 = vunpack.c.0.s8 %v2061
        %v2063 = vlaneseq
        %v2064 = vshrl.u32 %v2063, 7
        %v2065 = vsub.s32 %v2062, %v2064
        %v2066 = vrot.slane %v2058, %v2065
        %v2068 = vunpack.c.l.s4 1983009808
        %v2069 = vunpack.c.0.s8 %v2068
        %v2070 = vlaneseq
        %v2071 = vshrl.u32 %v2070, 7
        %v2072 = vsub.s32 %v2069, %v2071
        %v2073 = vrot.slane %v2059, %v2072
        %v2074 = vcombine.low %v1881, %v1889
        %v2075 = vcombine.high %v1881, %v1889
        %v2077 = vunpack.c.l.s4 1983009808
        %v2078 = vunpack.c.0.s8 %v2077
        %v2079 = vlaneseq
        %v2080 = vshrl.u32 %v2079, 7
        %v2081 = vsub.s32 %v2078, %v2080
        %v2082 = vrot.slane %v2074, %v2081
        %v2084 = vunpack.c.l.s4 1983009808
        %v2085 = vunpack.c.0.s8 %v2084
        %v2086 = vlaneseq
        %v2087 = vshrl.u32 %v2086, 7
        %v2088 = vsub.s32 %v2085, %v2087
        %v2089 = vrot.slane %v2075, %v2088
        %v2090 = vcombine.low %v1893, %v1901
        %v2091 = vcombine.high %v1893, %v1901
        %v2093 = vunpack.c.l.s4 1983009808
        %v2094 = vunpack.c.0.s8 %v2093
        %v2095 = vlaneseq
        %v2096 = vshrl.u32 %v2095, 7
        %v2097 = vsub.s32 %v2094, %v2096
        %v2098 = vrot.slane %v2090, %v2097
        %v2100 = vunpack.c.l.s4 1983009808
        %v2101 = vunpack.c.0.s8 %v2100
        %v2102 = vlaneseq
        %v2103 = vshrl.u32 %v2102, 7
        %v2104 = vsub.s32 %v2101, %v2103
        %v2105 = vrot.slane %v2091, %v2104
        %v2106 = vcombine.low %v1897, %v1905
        %v2107 = vcombine.high %v1897, %v1905
        %v2109 = vunpack.c.l.s4 1983009808
        %v2110 = vunpack.c.0.s8 %v2109
        %v2111 = vlaneseq
        %v2112 = vshrl.u32 %v2111, 7
        %v2113 = vsub.s32 %v2110, %v2112
        %v2114 = vrot.slane %v2106, %v2113
        %v2116 = vunpack.c.l.s4 1983009808
        %v2117 = vunpack.c.0.s8 %v2116
        %v2118 = vlaneseq
        %v2119 = vshrl.u32 %v2118, 7
        %v2120 = vsub.s32 %v2117, %v2119
        %v2121 = vrot.slane %v2107, %v2120
        %v2122 = vcombine.low %v2066, %v2082
        %v2123 = vcombine.high %v2066, %v2082
        %v2125 = vunpack.c.l.s4 1934713408
        %v2126 = vunpack.c.0.s8 %v2125
        %v2127 = vlaneseq
        %v2128 = vshrl.u32 %v2127, 7
        %v2129 = vsub.s32 %v2126, %v2128
        %v2130 = vrot.slane %v2122, %v2129
        %v2132 = vunpack.c.l.s4 1934713408
        %v2133 = vunpack.c.0.s8 %v2132
        %v2134 = vlaneseq
        %v2135 = vshrl.u32 %v2134, 7
        %v2136 = vsub.s32 %v2133, %v2135
        %v2137 = vrot.slane %v2123, %v2136
        %v2138 = vcombine.low %v2073, %v2089
        %v2139 = vcombine.high %v2073, %v2089
        %v2141 = vunpack.c.l.s4 1934713408
        %v2142 = vunpack.c.0.s8 %v2141
        %v2143 = vlaneseq
        %v2144 = vshrl.u32 %v2143, 7
        %v2145 = vsub.s32 %v2142, %v2144
        %v2146 = vrot.slane %v2138, %v2145
        %v2148 = vunpack.c.l.s4 1934713408
        %v2149 = vunpack.c.0.s8 %v2148
        %v2150 = vlaneseq
        %v2151 = vshrl.u32 %v2150, 7
        %v2152 = vsub.s32 %v2149, %v2151
        %v2153 = vrot.slane %v2139, %v2152
        %v2154 = vcombine.low %v2098, %v2114
        %v2155 = vcombine.high %v2098, %v2114
        %v2157 = vunpack.c.l.s4 1934713408
        %v2158 = vunpack.c.0.s8 %v2157
        %v2159 = vlaneseq
        %v2160 = vshrl.u32 %v2159, 7
        %v2161 = vsub.s32 %v2158, %v2160
        %v2162 = vrot.slane %v2154, %v2161
        %v2164 = vunpack.c.l.s4 1934713408
        %v2165 = vunpack.c.0.s8 %v2164
        %v2166 = vlaneseq
        %v2167 = vshrl.u32 %v2166, 7
        %v2168 = vsub.s32 %v2165, %v2167
        %v2169 = vrot.slane %v2155, %v2168
        %v2170 = vcombine.low %v2105, %v2121
        %v2171 = vcombine.high %v2105, %v2121
        %v2173 = vunpack.c.l.s4 1934713408
        %v2174 = vunpack.c.0.s8 %v2173
        %v2175 = vlaneseq
        %v2176 = vshrl.u32 %v2175, 7
        %v2177 = vsub.s32 %v2174, %v2176
        %v2178 = vrot.slane %v2170, %v2177
        %v2180 = vunpack.c.l.s4 1934713408
        %v2181 = vunpack.c.0.s8 %v2180
        %v2182 = vlaneseq
        %v2183 = vshrl.u32 %v2182, 7
        %v2184 = vsub.s32 %v2181, %v2183
        %v2185 = vrot.slane %v2171, %v2184
        %v2186 = vcombine.low %v2130, %v2162
        %v2187 = vcombine.high %v2130, %v2162
        %v2188 = vcombine.low %v2137, %v2169
        %v2189 = vcombine.high %v2137, %v2169
        %v2190 = vcombine.low %v2146, %v2178
        %v2191 = vcombine.high %v2146, %v2178
        %v2192 = vcombine.low %v2153, %v2185
        %v2193 = vcombine.high %v2153, %v2185
        %2195 = vrot.lane.b32.xlu0 %v2051, 16
        %v2196 = vpop.permute.xlu0 %2195
        %2199 = vrot.lane.b32.xlu0 %v2052, 32
        %v2200 = vpop.permute.xlu0 %2199
        %2203 = vrot.lane.b32.xlu0 %v2053, 48
        %v2204 = vpop.permute.xlu0 %2203
        %2207 = vrot.lane.b32.xlu0 %v2054, 64
        %v2208 = vpop.permute.xlu0 %2207
        %2211 = vrot.lane.b32.xlu0 %v2055, 80
        %v2212 = vpop.permute.xlu0 %2211
        %2215 = vrot.lane.b32.xlu0 %v2056, 96
        %v2216 = vpop.permute.xlu0 %2215
        %2219 = vrot.lane.b32.xlu0 %v2057, 112
        %v2220 = vpop.permute.xlu0 %2219
        %2223 = vrot.lane.b32.xlu0 %v2187, 16
        %v2224 = vpop.permute.xlu0 %2223
        %2227 = vrot.lane.b32.xlu0 %v2188, 32
        %v2228 = vpop.permute.xlu0 %2227
        %2231 = vrot.lane.b32.xlu0 %v2189, 48
        %v2232 = vpop.permute.xlu0 %2231
        %2235 = vrot.lane.b32.xlu0 %v2190, 64
        %v2236 = vpop.permute.xlu0 %2235
        %2239 = vrot.lane.b32.xlu0 %v2191, 80
        %v2240 = vpop.permute.xlu0 %2239
        %2243 = vrot.lane.b32.xlu0 %v2192, 96
        %v2244 = vpop.permute.xlu0 %2243
        %2247 = vrot.lane.b32.xlu0 %v2193, 112
        %v2248 = vpop.permute.xlu0 %2247
        %v2250 = vsel %vm683, %v2050, %v2196
        %v2251 = vsel %vm685, %v2250, %v2200
        %v2252 = vsel %vm687, %v2251, %v2204
        %v2253 = vsel %vm689, %v2252, %v2208
        %v2254 = vsel %vm691, %v2253, %v2212
        %v2255 = vsel %vm693, %v2254, %v2216
        %v2256 = vsel %vm695, %v2255, %v2220
        %v2257 = vsel %vm683, %v2186, %v2224
        %v2258 = vsel %vm685, %v2257, %v2228
        %v2259 = vsel %vm687, %v2258, %v2232
        %v2260 = vsel %vm689, %v2259, %v2236
        %v2261 = vsel %vm691, %v2260, %v2240
        %v2262 = vsel %vm693, %v2261, %v2244
        %v2263 = vsel %vm695, %v2262, %v2248
        %2264 = vrot.lane.b32.xlu0 %v1500, 124
        %v2265 = vpop.permute.xlu0 %2264
        %2266 = vrot.lane.b32.xlu0 %v1501, 124
        %v2267 = vpop.permute.xlu0 %2266
        %2268 = vrot.lane.b32.xlu0 %v1502, 124
        %v2269 = vpop.permute.xlu0 %2268
        %2270 = vrot.lane.b32.xlu0 %v1503, 124
        %v2271 = vpop.permute.xlu0 %2270
        %2272 = vrot.lane.b32.xlu0 %v1504, 124
        %v2273 = vpop.permute.xlu0 %2272
        %2274 = vrot.lane.b32.xlu0 %v1505, 124
        %v2275 = vpop.permute.xlu0 %2274
        %2276 = vrot.lane.b32.xlu0 %v1506, 124
        %v2277 = vpop.permute.xlu0 %2276
        %2278 = vrot.lane.b32.xlu0 %v1507, 124
        %v2279 = vpop.permute.xlu0 %2278
        %2280 = vrot.lane.b32.xlu0 %v1508, 124
        %v2281 = vpop.permute.xlu0 %2280
        %2282 = vrot.lane.b32.xlu0 %v1509, 124
        %v2283 = vpop.permute.xlu0 %2282
        %2284 = vrot.lane.b32.xlu0 %v1510, 124
        %v2285 = vpop.permute.xlu0 %2284
        %2286 = vrot.lane.b32.xlu0 %v1511, 124
        %v2287 = vpop.permute.xlu0 %2286
        %2288 = vrot.lane.b32.xlu0 %v1512, 124
        %v2289 = vpop.permute.xlu0 %2288
        %2290 = vrot.lane.b32.xlu0 %v1513, 124
        %v2291 = vpop.permute.xlu0 %2290
        %2292 = vrot.lane.b32.xlu0 %v1514, 124
        %v2293 = vpop.permute.xlu0 %2292
        %2294 = vrot.lane.b32.xlu0 %v1515, 124
        %v2295 = vpop.permute.xlu0 %2294
        %v2312 = vcombine.low %v2265, %v2273
        %v2313 = vcombine.high %v2265, %v2273
        %v2315 = vunpack.c.l.s4 1983009808
        %v2316 = vunpack.c.0.s8 %v2315
        %v2317 = vlaneseq
        %v2318 = vshrl.u32 %v2317, 7
        %v2319 = vsub.s32 %v2316, %v2318
        %v2320 = vrot.slane %v2312, %v2319
        %v2322 = vunpack.c.l.s4 1983009808
        %v2323 = vunpack.c.0.s8 %v2322
        %v2324 = vlaneseq
        %v2325 = vshrl.u32 %v2324, 7
        %v2326 = vsub.s32 %v2323, %v2325
        %v2327 = vrot.slane %v2313, %v2326
        %v2328 = vcombine.low %v2269, %v2277
        %v2329 = vcombine.high %v2269, %v2277
        %v2331 = vunpack.c.l.s4 1983009808
        %v2332 = vunpack.c.0.s8 %v2331
        %v2333 = vlaneseq
        %v2334 = vshrl.u32 %v2333, 7
        %v2335 = vsub.s32 %v2332, %v2334
        %v2336 = vrot.slane %v2328, %v2335
        %v2338 = vunpack.c.l.s4 1983009808
        %v2339 = vunpack.c.0.s8 %v2338
        %v2340 = vlaneseq
        %v2341 = vshrl.u32 %v2340, 7
        %v2342 = vsub.s32 %v2339, %v2341
        %v2343 = vrot.slane %v2329, %v2342
        %v2344 = vcombine.low %v2281, %v2289
        %v2345 = vcombine.high %v2281, %v2289
        %v2347 = vunpack.c.l.s4 1983009808
        %v2348 = vunpack.c.0.s8 %v2347
        %v2349 = vlaneseq
        %v2350 = vshrl.u32 %v2349, 7
        %v2351 = vsub.s32 %v2348, %v2350
        %v2352 = vrot.slane %v2344, %v2351
        %v2354 = vunpack.c.l.s4 1983009808
        %v2355 = vunpack.c.0.s8 %v2354
        %v2356 = vlaneseq
        %v2357 = vshrl.u32 %v2356, 7
        %v2358 = vsub.s32 %v2355, %v2357
        %v2359 = vrot.slane %v2345, %v2358
        %v2360 = vcombine.low %v2285, %v2293
        %v2361 = vcombine.high %v2285, %v2293
        %v2363 = vunpack.c.l.s4 1983009808
        %v2364 = vunpack.c.0.s8 %v2363
        %v2365 = vlaneseq
        %v2366 = vshrl.u32 %v2365, 7
        %v2367 = vsub.s32 %v2364, %v2366
        %v2368 = vrot.slane %v2360, %v2367
        %v2370 = vunpack.c.l.s4 1983009808
        %v2371 = vunpack.c.0.s8 %v2370
        %v2372 = vlaneseq
        %v2373 = vshrl.u32 %v2372, 7
        %v2374 = vsub.s32 %v2371, %v2373
        %v2375 = vrot.slane %v2361, %v2374
        %v2376 = vcombine.low %v2320, %v2336
        %v2377 = vcombine.high %v2320, %v2336
        %v2379 = vunpack.c.l.s4 1934713408
        %v2380 = vunpack.c.0.s8 %v2379
        %v2381 = vlaneseq
        %v2382 = vshrl.u32 %v2381, 7
        %v2383 = vsub.s32 %v2380, %v2382
        %v2384 = vrot.slane %v2376, %v2383
        %v2386 = vunpack.c.l.s4 1934713408
        %v2387 = vunpack.c.0.s8 %v2386
        %v2388 = vlaneseq
        %v2389 = vshrl.u32 %v2388, 7
        %v2390 = vsub.s32 %v2387, %v2389
        %v2391 = vrot.slane %v2377, %v2390
        %v2392 = vcombine.low %v2327, %v2343
        %v2393 = vcombine.high %v2327, %v2343
        %v2395 = vunpack.c.l.s4 1934713408
        %v2396 = vunpack.c.0.s8 %v2395
        %v2397 = vlaneseq
        %v2398 = vshrl.u32 %v2397, 7
        %v2399 = vsub.s32 %v2396, %v2398
        %v2400 = vrot.slane %v2392, %v2399
        %v2402 = vunpack.c.l.s4 1934713408
        %v2403 = vunpack.c.0.s8 %v2402
        %v2404 = vlaneseq
        %v2405 = vshrl.u32 %v2404, 7
        %v2406 = vsub.s32 %v2403, %v2405
        %v2407 = vrot.slane %v2393, %v2406
        %v2408 = vcombine.low %v2352, %v2368
        %v2409 = vcombine.high %v2352, %v2368
        %v2411 = vunpack.c.l.s4 1934713408
        %v2412 = vunpack.c.0.s8 %v2411
        %v2413 = vlaneseq
        %v2414 = vshrl.u32 %v2413, 7
        %v2415 = vsub.s32 %v2412, %v2414
        %v2416 = vrot.slane %v2408, %v2415
        %v2418 = vunpack.c.l.s4 1934713408
        %v2419 = vunpack.c.0.s8 %v2418
        %v2420 = vlaneseq
        %v2421 = vshrl.u32 %v2420, 7
        %v2422 = vsub.s32 %v2419, %v2421
        %v2423 = vrot.slane %v2409, %v2422
        %v2424 = vcombine.low %v2359, %v2375
        %v2425 = vcombine.high %v2359, %v2375
        %v2427 = vunpack.c.l.s4 1934713408
        %v2428 = vunpack.c.0.s8 %v2427
        %v2429 = vlaneseq
        %v2430 = vshrl.u32 %v2429, 7
        %v2431 = vsub.s32 %v2428, %v2430
        %v2432 = vrot.slane %v2424, %v2431
        %v2434 = vunpack.c.l.s4 1934713408
        %v2435 = vunpack.c.0.s8 %v2434
        %v2436 = vlaneseq
        %v2437 = vshrl.u32 %v2436, 7
        %v2438 = vsub.s32 %v2435, %v2437
        %v2439 = vrot.slane %v2425, %v2438
        %v2440 = vcombine.low %v2384, %v2416
        %v2441 = vcombine.high %v2384, %v2416
        %v2442 = vcombine.low %v2391, %v2423
        %v2443 = vcombine.high %v2391, %v2423
        %v2444 = vcombine.low %v2400, %v2432
        %v2445 = vcombine.high %v2400, %v2432
        %v2446 = vcombine.low %v2407, %v2439
        %v2447 = vcombine.high %v2407, %v2439
        %v2448 = vcombine.low %v2267, %v2275
        %v2449 = vcombine.high %v2267, %v2275
        %v2451 = vunpack.c.l.s4 1983009808
        %v2452 = vunpack.c.0.s8 %v2451
        %v2453 = vlaneseq
        %v2454 = vshrl.u32 %v2453, 7
        %v2455 = vsub.s32 %v2452, %v2454
        %v2456 = vrot.slane %v2448, %v2455
        %v2458 = vunpack.c.l.s4 1983009808
        %v2459 = vunpack.c.0.s8 %v2458
        %v2460 = vlaneseq
        %v2461 = vshrl.u32 %v2460, 7
        %v2462 = vsub.s32 %v2459, %v2461
        %v2463 = vrot.slane %v2449, %v2462
        %v2464 = vcombine.low %v2271, %v2279
        %v2465 = vcombine.high %v2271, %v2279
        %v2467 = vunpack.c.l.s4 1983009808
        %v2468 = vunpack.c.0.s8 %v2467
        %v2469 = vlaneseq
        %v2470 = vshrl.u32 %v2469, 7
        %v2471 = vsub.s32 %v2468, %v2470
        %v2472 = vrot.slane %v2464, %v2471
        %v2474 = vunpack.c.l.s4 1983009808
        %v2475 = vunpack.c.0.s8 %v2474
        %v2476 = vlaneseq
        %v2477 = vshrl.u32 %v2476, 7
        %v2478 = vsub.s32 %v2475, %v2477
        %v2479 = vrot.slane %v2465, %v2478
        %v2480 = vcombine.low %v2283, %v2291
        %v2481 = vcombine.high %v2283, %v2291
        %v2483 = vunpack.c.l.s4 1983009808
        %v2484 = vunpack.c.0.s8 %v2483
        %v2485 = vlaneseq
        %v2486 = vshrl.u32 %v2485, 7
        %v2487 = vsub.s32 %v2484, %v2486
        %v2488 = vrot.slane %v2480, %v2487
        %v2490 = vunpack.c.l.s4 1983009808
        %v2491 = vunpack.c.0.s8 %v2490
        %v2492 = vlaneseq
        %v2493 = vshrl.u32 %v2492, 7
        %v2494 = vsub.s32 %v2491, %v2493
        %v2495 = vrot.slane %v2481, %v2494
        %v2496 = vcombine.low %v2287, %v2295
        %v2497 = vcombine.high %v2287, %v2295
        %v2499 = vunpack.c.l.s4 1983009808
        %v2500 = vunpack.c.0.s8 %v2499
        %v2501 = vlaneseq
        %v2502 = vshrl.u32 %v2501, 7
        %v2503 = vsub.s32 %v2500, %v2502
        %v2504 = vrot.slane %v2496, %v2503
        %v2506 = vunpack.c.l.s4 1983009808
        %v2507 = vunpack.c.0.s8 %v2506
        %v2508 = vlaneseq
        %v2509 = vshrl.u32 %v2508, 7
        %v2510 = vsub.s32 %v2507, %v2509
        %v2511 = vrot.slane %v2497, %v2510
        %v2512 = vcombine.low %v2456, %v2472
        %v2513 = vcombine.high %v2456, %v2472
        %v2515 = vunpack.c.l.s4 1934713408
        %v2516 = vunpack.c.0.s8 %v2515
        %v2517 = vlaneseq
        %v2518 = vshrl.u32 %v2517, 7
        %v2519 = vsub.s32 %v2516, %v2518
        %v2520 = vrot.slane %v2512, %v2519
        %v2522 = vunpack.c.l.s4 1934713408
        %v2523 = vunpack.c.0.s8 %v2522
        %v2524 = vlaneseq
        %v2525 = vshrl.u32 %v2524, 7
        %v2526 = vsub.s32 %v2523, %v2525
        %v2527 = vrot.slane %v2513, %v2526
        %v2528 = vcombine.low %v2463, %v2479
        %v2529 = vcombine.high %v2463, %v2479
        %v2531 = vunpack.c.l.s4 1934713408
        %v2532 = vunpack.c.0.s8 %v2531
        %v2533 = vlaneseq
        %v2534 = vshrl.u32 %v2533, 7
        %v2535 = vsub.s32 %v2532, %v2534
        %v2536 = vrot.slane %v2528, %v2535
        %v2538 = vunpack.c.l.s4 1934713408
        %v2539 = vunpack.c.0.s8 %v2538
        %v2540 = vlaneseq
        %v2541 = vshrl.u32 %v2540, 7
        %v2542 = vsub.s32 %v2539, %v2541
        %v2543 = vrot.slane %v2529, %v2542
        %v2544 = vcombine.low %v2488, %v2504
        %v2545 = vcombine.high %v2488, %v2504
        %v2547 = vunpack.c.l.s4 1934713408
        %v2548 = vunpack.c.0.s8 %v2547
        %v2549 = vlaneseq
        %v2550 = vshrl.u32 %v2549, 7
        %v2551 = vsub.s32 %v2548, %v2550
        %v2552 = vrot.slane %v2544, %v2551
        %v2554 = vunpack.c.l.s4 1934713408
        %v2555 = vunpack.c.0.s8 %v2554
        %v2556 = vlaneseq
        %v2557 = vshrl.u32 %v2556, 7
        %v2558 = vsub.s32 %v2555, %v2557
        %v2559 = vrot.slane %v2545, %v2558
        %v2560 = vcombine.low %v2495, %v2511
        %v2561 = vcombine.high %v2495, %v2511
        %v2563 = vunpack.c.l.s4 1934713408
        %v2564 = vunpack.c.0.s8 %v2563
        %v2565 = vlaneseq
        %v2566 = vshrl.u32 %v2565, 7
        %v2567 = vsub.s32 %v2564, %v2566
        %v2568 = vrot.slane %v2560, %v2567
        %v2570 = vunpack.c.l.s4 1934713408
        %v2571 = vunpack.c.0.s8 %v2570
        %v2572 = vlaneseq
        %v2573 = vshrl.u32 %v2572, 7
        %v2574 = vsub.s32 %v2571, %v2573
        %v2575 = vrot.slane %v2561, %v2574
        %v2576 = vcombine.low %v2520, %v2552
        %v2577 = vcombine.high %v2520, %v2552
        %v2578 = vcombine.low %v2527, %v2559
        %v2579 = vcombine.high %v2527, %v2559
        %v2580 = vcombine.low %v2536, %v2568
        %v2581 = vcombine.high %v2536, %v2568
        %v2582 = vcombine.low %v2543, %v2575
        %v2583 = vcombine.high %v2543, %v2575
        %2585 = vrot.lane.b32.xlu0 %v2441, 16
        %v2586 = vpop.permute.xlu0 %2585
        %2589 = vrot.lane.b32.xlu0 %v2442, 32
        %v2590 = vpop.permute.xlu0 %2589
        %2593 = vrot.lane.b32.xlu0 %v2443, 48
        %v2594 = vpop.permute.xlu0 %2593
        %2597 = vrot.lane.b32.xlu0 %v2444, 64
        %v2598 = vpop.permute.xlu0 %2597
        %2601 = vrot.lane.b32.xlu0 %v2445, 80
        %v2602 = vpop.permute.xlu0 %2601
        %2605 = vrot.lane.b32.xlu0 %v2446, 96
        %v2606 = vpop.permute.xlu0 %2605
        %2609 = vrot.lane.b32.xlu0 %v2447, 112
        %v2610 = vpop.permute.xlu0 %2609
        %2613 = vrot.lane.b32.xlu0 %v2577, 16
        %v2614 = vpop.permute.xlu0 %2613
        %2617 = vrot.lane.b32.xlu0 %v2578, 32
        %v2618 = vpop.permute.xlu0 %2617
        %2621 = vrot.lane.b32.xlu0 %v2579, 48
        %v2622 = vpop.permute.xlu0 %2621
        %2625 = vrot.lane.b32.xlu0 %v2580, 64
        %v2626 = vpop.permute.xlu0 %2625
        %2629 = vrot.lane.b32.xlu0 %v2581, 80
        %v2630 = vpop.permute.xlu0 %2629
        %2633 = vrot.lane.b32.xlu0 %v2582, 96
        %v2634 = vpop.permute.xlu0 %2633
        %2637 = vrot.lane.b32.xlu0 %v2583, 112
        %v2638 = vpop.permute.xlu0 %2637
        %v2640 = vsel %vm683, %v2440, %v2586
        %v2641 = vsel %vm685, %v2640, %v2590
        %v2642 = vsel %vm687, %v2641, %v2594
        %v2643 = vsel %vm689, %v2642, %v2598
        %v2644 = vsel %vm691, %v2643, %v2602
        %v2645 = vsel %vm693, %v2644, %v2606
        %v2646 = vsel %vm695, %v2645, %v2610
        %v2647 = vsel %vm683, %v2576, %v2614
        %v2648 = vsel %vm685, %v2647, %v2618
        %v2649 = vsel %vm687, %v2648, %v2622
        %v2650 = vsel %vm689, %v2649, %v2626
        %v2651 = vsel %vm691, %v2650, %v2630
        %v2652 = vsel %vm693, %v2651, %v2634
        %v2653 = vsel %vm695, %v2652, %v2638
        %v2654 = vld [vmem:[#allocation2 + $0x4] sm:$0xff]
        %v2655 = vld [vmem:[#allocation2 + $0xc] sm:$0xff]
        %v2656 = vld [vmem:[#allocation2 + $0x1c] sm:$0xff]
        %v2657 = vld [vmem:[#allocation2 + $0x24] sm:$0xff]
        %v2658 = vld [vmem:[#allocation2 + $0x34] sm:$0xff]
        %v2659 = vld [vmem:[#allocation2 + $0x3c] sm:$0xff]
        %v2660 = vld [vmem:[#allocation2 + $0x4c] sm:$0xff]
        %v2661 = vld [vmem:[#allocation2 + $0x54] sm:$0xff]
        %v2662 = vld [vmem:[#allocation2 + $0x64] sm:$0xff]
        %v2663 = vld [vmem:[#allocation2 + $0x6c] sm:$0xff]
        %v2664 = vld [vmem:[#allocation2 + $0x7c] sm:$0xff]
        %v2665 = vld [vmem:[#allocation2 + $0x84] sm:$0xff]
        %v2666 = vld [vmem:[#allocation2 + $0x94] sm:$0xff]
        %v2667 = vld [vmem:[#allocation2 + $0x9c] sm:$0xff]
        %v2668 = vld [vmem:[#allocation2 + $0xac] sm:$0xff]
        %v2669 = vld [vmem:[#allocation2 + $0xb4] sm:$0xff]
        %v2670 = vcombine.low %v2654, %v2658
        %v2671 = vcombine.high %v2654, %v2658
        %v2673 = vunpack.c.l.s4 1983009808
        %v2674 = vunpack.c.0.s8 %v2673
        %v2675 = vlaneseq
        %v2676 = vshrl.u32 %v2675, 7
        %v2677 = vsub.s32 %v2674, %v2676
        %v2678 = vrot.slane %v2670, %v2677
        %v2680 = vunpack.c.l.s4 1983009808
        %v2681 = vunpack.c.0.s8 %v2680
        %v2682 = vlaneseq
        %v2683 = vshrl.u32 %v2682, 7
        %v2684 = vsub.s32 %v2681, %v2683
        %v2685 = vrot.slane %v2671, %v2684
        %v2686 = vcombine.low %v2656, %v2660
        %v2687 = vcombine.high %v2656, %v2660
        %v2689 = vunpack.c.l.s4 1983009808
        %v2690 = vunpack.c.0.s8 %v2689
        %v2691 = vlaneseq
        %v2692 = vshrl.u32 %v2691, 7
        %v2693 = vsub.s32 %v2690, %v2692
        %v2694 = vrot.slane %v2686, %v2693
        %v2696 = vunpack.c.l.s4 1983009808
        %v2697 = vunpack.c.0.s8 %v2696
        %v2698 = vlaneseq
        %v2699 = vshrl.u32 %v2698, 7
        %v2700 = vsub.s32 %v2697, %v2699
        %v2701 = vrot.slane %v2687, %v2700
        %v2702 = vcombine.low %v2662, %v2666
        %v2703 = vcombine.high %v2662, %v2666
        %v2705 = vunpack.c.l.s4 1983009808
        %v2706 = vunpack.c.0.s8 %v2705
        %v2707 = vlaneseq
        %v2708 = vshrl.u32 %v2707, 7
        %v2709 = vsub.s32 %v2706, %v2708
        %v2710 = vrot.slane %v2702, %v2709
        %v2712 = vunpack.c.l.s4 1983009808
        %v2713 = vunpack.c.0.s8 %v2712
        %v2714 = vlaneseq
        %v2715 = vshrl.u32 %v2714, 7
        %v2716 = vsub.s32 %v2713, %v2715
        %v2717 = vrot.slane %v2703, %v2716
        %v2718 = vcombine.low %v2664, %v2668
        %v2719 = vcombine.high %v2664, %v2668
        %v2721 = vunpack.c.l.s4 1983009808
        %v2722 = vunpack.c.0.s8 %v2721
        %v2723 = vlaneseq
        %v2724 = vshrl.u32 %v2723, 7
        %v2725 = vsub.s32 %v2722, %v2724
        %v2726 = vrot.slane %v2718, %v2725
        %v2728 = vunpack.c.l.s4 1983009808
        %v2729 = vunpack.c.0.s8 %v2728
        %v2730 = vlaneseq
        %v2731 = vshrl.u32 %v2730, 7
        %v2732 = vsub.s32 %v2729, %v2731
        %v2733 = vrot.slane %v2719, %v2732
        %v2734 = vcombine.low %v2678, %v2694
        %v2735 = vcombine.high %v2678, %v2694
        %v2737 = vunpack.c.l.s4 1934713408
        %v2738 = vunpack.c.0.s8 %v2737
        %v2739 = vlaneseq
        %v2740 = vshrl.u32 %v2739, 7
        %v2741 = vsub.s32 %v2738, %v2740
        %v2742 = vrot.slane %v2734, %v2741
        %v2744 = vunpack.c.l.s4 1934713408
        %v2745 = vunpack.c.0.s8 %v2744
        %v2746 = vlaneseq
        %v2747 = vshrl.u32 %v2746, 7
        %v2748 = vsub.s32 %v2745, %v2747
        %v2749 = vrot.slane %v2735, %v2748
        %v2750 = vcombine.low %v2685, %v2701
        %v2751 = vcombine.high %v2685, %v2701
        %v2753 = vunpack.c.l.s4 1934713408
        %v2754 = vunpack.c.0.s8 %v2753
        %v2755 = vlaneseq
        %v2756 = vshrl.u32 %v2755, 7
        %v2757 = vsub.s32 %v2754, %v2756
        %v2758 = vrot.slane %v2750, %v2757
        %v2760 = vunpack.c.l.s4 1934713408
        %v2761 = vunpack.c.0.s8 %v2760
        %v2762 = vlaneseq
        %v2763 = vshrl.u32 %v2762, 7
        %v2764 = vsub.s32 %v2761, %v2763
        %v2765 = vrot.slane %v2751, %v2764
        %v2766 = vcombine.low %v2710, %v2726
        %v2767 = vcombine.high %v2710, %v2726
        %v2769 = vunpack.c.l.s4 1934713408
        %v2770 = vunpack.c.0.s8 %v2769
        %v2771 = vlaneseq
        %v2772 = vshrl.u32 %v2771, 7
        %v2773 = vsub.s32 %v2770, %v2772
        %v2774 = vrot.slane %v2766, %v2773
        %v2776 = vunpack.c.l.s4 1934713408
        %v2777 = vunpack.c.0.s8 %v2776
        %v2778 = vlaneseq
        %v2779 = vshrl.u32 %v2778, 7
        %v2780 = vsub.s32 %v2777, %v2779
        %v2781 = vrot.slane %v2767, %v2780
        %v2782 = vcombine.low %v2717, %v2733
        %v2783 = vcombine.high %v2717, %v2733
        %v2785 = vunpack.c.l.s4 1934713408
        %v2786 = vunpack.c.0.s8 %v2785
        %v2787 = vlaneseq
        %v2788 = vshrl.u32 %v2787, 7
        %v2789 = vsub.s32 %v2786, %v2788
        %v2790 = vrot.slane %v2782, %v2789
        %v2792 = vunpack.c.l.s4 1934713408
        %v2793 = vunpack.c.0.s8 %v2792
        %v2794 = vlaneseq
        %v2795 = vshrl.u32 %v2794, 7
        %v2796 = vsub.s32 %v2793, %v2795
        %v2797 = vrot.slane %v2783, %v2796
        %v2798 = vcombine.low %v2742, %v2774
        %v2799 = vcombine.high %v2742, %v2774
        %v2800 = vcombine.low %v2749, %v2781
        %v2801 = vcombine.high %v2749, %v2781
        %v2802 = vcombine.low %v2758, %v2790
        %v2803 = vcombine.high %v2758, %v2790
        %v2804 = vcombine.low %v2765, %v2797
        %v2805 = vcombine.high %v2765, %v2797
        %v2806 = vcombine.low %v2655, %v2659
        %v2807 = vcombine.high %v2655, %v2659
        %v2809 = vunpack.c.l.s4 1983009808
        %v2810 = vunpack.c.0.s8 %v2809
        %v2811 = vlaneseq
        %v2812 = vshrl.u32 %v2811, 7
        %v2813 = vsub.s32 %v2810, %v2812
        %v2814 = vrot.slane %v2806, %v2813
        %v2816 = vunpack.c.l.s4 1983009808
        %v2817 = vunpack.c.0.s8 %v2816
        %v2818 = vlaneseq
        %v2819 = vshrl.u32 %v2818, 7
        %v2820 = vsub.s32 %v2817, %v2819
        %v2821 = vrot.slane %v2807, %v2820
        %v2822 = vcombine.low %v2657, %v2661
        %v2823 = vcombine.high %v2657, %v2661
        %v2825 = vunpack.c.l.s4 1983009808
        %v2826 = vunpack.c.0.s8 %v2825
        %v2827 = vlaneseq
        %v2828 = vshrl.u32 %v2827, 7
        %v2829 = vsub.s32 %v2826, %v2828
        %v2830 = vrot.slane %v2822, %v2829
        %v2832 = vunpack.c.l.s4 1983009808
        %v2833 = vunpack.c.0.s8 %v2832
        %v2834 = vlaneseq
        %v2835 = vshrl.u32 %v2834, 7
        %v2836 = vsub.s32 %v2833, %v2835
        %v2837 = vrot.slane %v2823, %v2836
        %v2838 = vcombine.low %v2663, %v2667
        %v2839 = vcombine.high %v2663, %v2667
        %v2841 = vunpack.c.l.s4 1983009808
        %v2842 = vunpack.c.0.s8 %v2841
        %v2843 = vlaneseq
        %v2844 = vshrl.u32 %v2843, 7
        %v2845 = vsub.s32 %v2842, %v2844
        %v2846 = vrot.slane %v2838, %v2845
        %v2848 = vunpack.c.l.s4 1983009808
        %v2849 = vunpack.c.0.s8 %v2848
        %v2850 = vlaneseq
        %v2851 = vshrl.u32 %v2850, 7
        %v2852 = vsub.s32 %v2849, %v2851
        %v2853 = vrot.slane %v2839, %v2852
        %v2854 = vcombine.low %v2665, %v2669
        %v2855 = vcombine.high %v2665, %v2669
        %v2857 = vunpack.c.l.s4 1983009808
        %v2858 = vunpack.c.0.s8 %v2857
        %v2859 = vlaneseq
        %v2860 = vshrl.u32 %v2859, 7
        %v2861 = vsub.s32 %v2858, %v2860
        %v2862 = vrot.slane %v2854, %v2861
        %v2864 = vunpack.c.l.s4 1983009808
        %v2865 = vunpack.c.0.s8 %v2864
        %v2866 = vlaneseq
        %v2867 = vshrl.u32 %v2866, 7
        %v2868 = vsub.s32 %v2865, %v2867
        %v2869 = vrot.slane %v2855, %v2868
        %v2870 = vcombine.low %v2814, %v2830
        %v2871 = vcombine.high %v2814, %v2830
        %v2873 = vunpack.c.l.s4 1934713408
        %v2874 = vunpack.c.0.s8 %v2873
        %v2875 = vlaneseq
        %v2876 = vshrl.u32 %v2875, 7
        %v2877 = vsub.s32 %v2874, %v2876
        %v2878 = vrot.slane %v2870, %v2877
        %v2880 = vunpack.c.l.s4 1934713408
        %v2881 = vunpack.c.0.s8 %v2880
        %v2882 = vlaneseq
        %v2883 = vshrl.u32 %v2882, 7
        %v2884 = vsub.s32 %v2881, %v2883
        %v2885 = vrot.slane %v2871, %v2884
        %v2886 = vcombine.low %v2821, %v2837
        %v2887 = vcombine.high %v2821, %v2837
        %v2889 = vunpack.c.l.s4 1934713408
        %v2890 = vunpack.c.0.s8 %v2889
        %v2891 = vlaneseq
        %v2892 = vshrl.u32 %v2891, 7
        %v2893 = vsub.s32 %v2890, %v2892
        %v2894 = vrot.slane %v2886, %v2893
        %v2896 = vunpack.c.l.s4 1934713408
        %v2897 = vunpack.c.0.s8 %v2896
        %v2898 = vlaneseq
        %v2899 = vshrl.u32 %v2898, 7
        %v2900 = vsub.s32 %v2897, %v2899
        %v2901 = vrot.slane %v2887, %v2900
        %v2902 = vcombine.low %v2846, %v2862
        %v2903 = vcombine.high %v2846, %v2862
        %v2905 = vunpack.c.l.s4 1934713408
        %v2906 = vunpack.c.0.s8 %v2905
        %v2907 = vlaneseq
        %v2908 = vshrl.u32 %v2907, 7
        %v2909 = vsub.s32 %v2906, %v2908
        %v2910 = vrot.slane %v2902, %v2909
        %v2912 = vunpack.c.l.s4 1934713408
        %v2913 = vunpack.c.0.s8 %v2912
        %v2914 = vlaneseq
        %v2915 = vshrl.u32 %v2914, 7
        %v2916 = vsub.s32 %v2913, %v2915
        %v2917 = vrot.slane %v2903, %v2916
        %v2918 = vcombine.low %v2853, %v2869
        %v2919 = vcombine.high %v2853, %v2869
        %v2921 = vunpack.c.l.s4 1934713408
        %v2922 = vunpack.c.0.s8 %v2921
        %v2923 = vlaneseq
        %v2924 = vshrl.u32 %v2923, 7
        %v2925 = vsub.s32 %v2922, %v2924
        %v2926 = vrot.slane %v2918, %v2925
        %v2928 = vunpack.c.l.s4 1934713408
        %v2929 = vunpack.c.0.s8 %v2928
        %v2930 = vlaneseq
        %v2931 = vshrl.u32 %v2930, 7
        %v2932 = vsub.s32 %v2929, %v2931
        %v2933 = vrot.slane %v2919, %v2932
        %v2934 = vcombine.low %v2878, %v2910
        %v2935 = vcombine.high %v2878, %v2910
        %v2936 = vcombine.low %v2885, %v2917
        %v2937 = vcombine.high %v2885, %v2917
        %v2938 = vcombine.low %v2894, %v2926
        %v2939 = vcombine.high %v2894, %v2926
        %v2940 = vcombine.low %v2901, %v2933
        %v2941 = vcombine.high %v2901, %v2933
        %2943 = vrot.lane.b32.xlu0 %v2799, 16
        %v2944 = vpop.permute.xlu0 %2943
        %2947 = vrot.lane.b32.xlu0 %v2800, 32
        %v2948 = vpop.permute.xlu0 %2947
        %2951 = vrot.lane.b32.xlu0 %v2801, 48
        %v2952 = vpop.permute.xlu0 %2951
        %2955 = vrot.lane.b32.xlu0 %v2802, 64
        %v2956 = vpop.permute.xlu0 %2955
        %2959 = vrot.lane.b32.xlu0 %v2803, 80
        %v2960 = vpop.permute.xlu0 %2959
        %2963 = vrot.lane.b32.xlu0 %v2804, 96
        %v2964 = vpop.permute.xlu0 %2963
        %2967 = vrot.lane.b32.xlu0 %v2805, 112
        %v2968 = vpop.permute.xlu0 %2967
        %2971 = vrot.lane.b32.xlu0 %v2935, 16
        %v2972 = vpop.permute.xlu0 %2971
        %2975 = vrot.lane.b32.xlu0 %v2936, 32
        %v2976 = vpop.permute.xlu0 %2975
        %2979 = vrot.lane.b32.xlu0 %v2937, 48
        %v2980 = vpop.permute.xlu0 %2979
        %2983 = vrot.lane.b32.xlu0 %v2938, 64
        %v2984 = vpop.permute.xlu0 %2983
        %2987 = vrot.lane.b32.xlu0 %v2939, 80
        %v2988 = vpop.permute.xlu0 %2987
        %2991 = vrot.lane.b32.xlu0 %v2940, 96
        %v2992 = vpop.permute.xlu0 %2991
        %2995 = vrot.lane.b32.xlu0 %v2941, 112
        %v2996 = vpop.permute.xlu0 %2995
        %v2998 = vsel %vm683, %v2798, %v2944
        %v2999 = vsel %vm685, %v2998, %v2948
        %v3000 = vsel %vm687, %v2999, %v2952
        %v3001 = vsel %vm689, %v3000, %v2956
        %v3002 = vsel %vm691, %v3001, %v2960
        %v3003 = vsel %vm693, %v3002, %v2964
        %v3004 = vsel %vm695, %v3003, %v2968
        %v3005 = vsel %vm683, %v2934, %v2972
        %v3006 = vsel %vm685, %v3005, %v2976
        %v3007 = vsel %vm687, %v3006, %v2980
        %v3008 = vsel %vm689, %v3007, %v2984
        %v3009 = vsel %vm691, %v3008, %v2988
        %v3010 = vsel %vm693, %v3009, %v2992
        %v3011 = vsel %vm695, %v3010, %v2996
        %3028 = vrot.lane.b32.xlu0 %v2654, 126
        %v3029 = vpop.permute.xlu0 %3028
        %3030 = vrot.lane.b32.xlu0 %v2655, 126
        %v3031 = vpop.permute.xlu0 %3030
        %3032 = vrot.lane.b32.xlu0 %v2656, 126
        %v3033 = vpop.permute.xlu0 %3032
        %3034 = vrot.lane.b32.xlu0 %v2657, 126
        %v3035 = vpop.permute.xlu0 %3034
        %3036 = vrot.lane.b32.xlu0 %v2658, 126
        %v3037 = vpop.permute.xlu0 %3036
        %3038 = vrot.lane.b32.xlu0 %v2659, 126
        %v3039 = vpop.permute.xlu0 %3038
        %3040 = vrot.lane.b32.xlu0 %v2660, 126
        %v3041 = vpop.permute.xlu0 %3040
        %3042 = vrot.lane.b32.xlu0 %v2661, 126
        %v3043 = vpop.permute.xlu0 %3042
        %3044 = vrot.lane.b32.xlu0 %v2662, 126
        %v3045 = vpop.permute.xlu0 %3044
        %3046 = vrot.lane.b32.xlu0 %v2663, 126
        %v3047 = vpop.permute.xlu0 %3046
        %3048 = vrot.lane.b32.xlu0 %v2664, 126
        %v3049 = vpop.permute.xlu0 %3048
        %3050 = vrot.lane.b32.xlu0 %v2665, 126
        %v3051 = vpop.permute.xlu0 %3050
        %3052 = vrot.lane.b32.xlu0 %v2666, 126
        %v3053 = vpop.permute.xlu0 %3052
        %3054 = vrot.lane.b32.xlu0 %v2667, 126
        %v3055 = vpop.permute.xlu0 %3054
        %3056 = vrot.lane.b32.xlu0 %v2668, 126
        %v3057 = vpop.permute.xlu0 %3056
        %3058 = vrot.lane.b32.xlu0 %v2669, 126
        %v3059 = vpop.permute.xlu0 %3058
        %v3076 = vcombine.low %v3029, %v3037
        %v3077 = vcombine.high %v3029, %v3037
        %v3079 = vunpack.c.l.s4 1983009808
        %v3080 = vunpack.c.0.s8 %v3079
        %v3081 = vlaneseq
        %v3082 = vshrl.u32 %v3081, 7
        %v3083 = vsub.s32 %v3080, %v3082
        %v3084 = vrot.slane %v3076, %v3083
        %v3086 = vunpack.c.l.s4 1983009808
        %v3087 = vunpack.c.0.s8 %v3086
        %v3088 = vlaneseq
        %v3089 = vshrl.u32 %v3088, 7
        %v3090 = vsub.s32 %v3087, %v3089
        %v3091 = vrot.slane %v3077, %v3090
        %v3092 = vcombine.low %v3033, %v3041
        %v3093 = vcombine.high %v3033, %v3041
        %v3095 = vunpack.c.l.s4 1983009808
        %v3096 = vunpack.c.0.s8 %v3095
        %v3097 = vlaneseq
        %v3098 = vshrl.u32 %v3097, 7
        %v3099 = vsub.s32 %v3096, %v3098
        %v3100 = vrot.slane %v3092, %v3099
        %v3102 = vunpack.c.l.s4 1983009808
        %v3103 = vunpack.c.0.s8 %v3102
        %v3104 = vlaneseq
        %v3105 = vshrl.u32 %v3104, 7
        %v3106 = vsub.s32 %v3103, %v3105
        %v3107 = vrot.slane %v3093, %v3106
        %v3108 = vcombine.low %v3045, %v3053
        %v3109 = vcombine.high %v3045, %v3053
        %v3111 = vunpack.c.l.s4 1983009808
        %v3112 = vunpack.c.0.s8 %v3111
        %v3113 = vlaneseq
        %v3114 = vshrl.u32 %v3113, 7
        %v3115 = vsub.s32 %v3112, %v3114
        %v3116 = vrot.slane %v3108, %v3115
        %v3118 = vunpack.c.l.s4 1983009808
        %v3119 = vunpack.c.0.s8 %v3118
        %v3120 = vlaneseq
        %v3121 = vshrl.u32 %v3120, 7
        %v3122 = vsub.s32 %v3119, %v3121
        %v3123 = vrot.slane %v3109, %v3122
        %v3124 = vcombine.low %v3049, %v3057
        %v3125 = vcombine.high %v3049, %v3057
        %v3127 = vunpack.c.l.s4 1983009808
        %v3128 = vunpack.c.0.s8 %v3127
        %v3129 = vlaneseq
        %v3130 = vshrl.u32 %v3129, 7
        %v3131 = vsub.s32 %v3128, %v3130
        %v3132 = vrot.slane %v3124, %v3131
        %v3134 = vunpack.c.l.s4 1983009808
        %v3135 = vunpack.c.0.s8 %v3134
        %v3136 = vlaneseq
        %v3137 = vshrl.u32 %v3136, 7
        %v3138 = vsub.s32 %v3135, %v3137
        %v3139 = vrot.slane %v3125, %v3138
        %v3140 = vcombine.low %v3084, %v3100
        %v3141 = vcombine.high %v3084, %v3100
        %v3143 = vunpack.c.l.s4 1934713408
        %v3144 = vunpack.c.0.s8 %v3143
        %v3145 = vlaneseq
        %v3146 = vshrl.u32 %v3145, 7
        %v3147 = vsub.s32 %v3144, %v3146
        %v3148 = vrot.slane %v3140, %v3147
        %v3150 = vunpack.c.l.s4 1934713408
        %v3151 = vunpack.c.0.s8 %v3150
        %v3152 = vlaneseq
        %v3153 = vshrl.u32 %v3152, 7
        %v3154 = vsub.s32 %v3151, %v3153
        %v3155 = vrot.slane %v3141, %v3154
        %v3156 = vcombine.low %v3091, %v3107
        %v3157 = vcombine.high %v3091, %v3107
        %v3159 = vunpack.c.l.s4 1934713408
        %v3160 = vunpack.c.0.s8 %v3159
        %v3161 = vlaneseq
        %v3162 = vshrl.u32 %v3161, 7
        %v3163 = vsub.s32 %v3160, %v3162
        %v3164 = vrot.slane %v3156, %v3163
        %v3166 = vunpack.c.l.s4 1934713408
        %v3167 = vunpack.c.0.s8 %v3166
        %v3168 = vlaneseq
        %v3169 = vshrl.u32 %v3168, 7
        %v3170 = vsub.s32 %v3167, %v3169
        %v3171 = vrot.slane %v3157, %v3170
        %v3172 = vcombine.low %v3116, %v3132
        %v3173 = vcombine.high %v3116, %v3132
        %v3175 = vunpack.c.l.s4 1934713408
        %v3176 = vunpack.c.0.s8 %v3175
        %v3177 = vlaneseq
        %v3178 = vshrl.u32 %v3177, 7
        %v3179 = vsub.s32 %v3176, %v3178
        %v3180 = vrot.slane %v3172, %v3179
        %v3182 = vunpack.c.l.s4 1934713408
        %v3183 = vunpack.c.0.s8 %v3182
        %v3184 = vlaneseq
        %v3185 = vshrl.u32 %v3184, 7
        %v3186 = vsub.s32 %v3183, %v3185
        %v3187 = vrot.slane %v3173, %v3186
        %v3188 = vcombine.low %v3123, %v3139
        %v3189 = vcombine.high %v3123, %v3139
        %v3191 = vunpack.c.l.s4 1934713408
        %v3192 = vunpack.c.0.s8 %v3191
        %v3193 = vlaneseq
        %v3194 = vshrl.u32 %v3193, 7
        %v3195 = vsub.s32 %v3192, %v3194
        %v3196 = vrot.slane %v3188, %v3195
        %v3198 = vunpack.c.l.s4 1934713408
        %v3199 = vunpack.c.0.s8 %v3198
        %v3200 = vlaneseq
        %v3201 = vshrl.u32 %v3200, 7
        %v3202 = vsub.s32 %v3199, %v3201
        %v3203 = vrot.slane %v3189, %v3202
        %v3204 = vcombine.low %v3148, %v3180
        %v3205 = vcombine.high %v3148, %v3180
        %v3206 = vcombine.low %v3155, %v3187
        %v3207 = vcombine.high %v3155, %v3187
        %v3208 = vcombine.low %v3164, %v3196
        %v3209 = vcombine.high %v3164, %v3196
        %v3210 = vcombine.low %v3171, %v3203
        %v3211 = vcombine.high %v3171, %v3203
        %v3212 = vcombine.low %v3031, %v3039
        %v3213 = vcombine.high %v3031, %v3039
        %v3215 = vunpack.c.l.s4 1983009808
        %v3216 = vunpack.c.0.s8 %v3215
        %v3217 = vlaneseq
        %v3218 = vshrl.u32 %v3217, 7
        %v3219 = vsub.s32 %v3216, %v3218
        %v3220 = vrot.slane %v3212, %v3219
        %v3222 = vunpack.c.l.s4 1983009808
        %v3223 = vunpack.c.0.s8 %v3222
        %v3224 = vlaneseq
        %v3225 = vshrl.u32 %v3224, 7
        %v3226 = vsub.s32 %v3223, %v3225
        %v3227 = vrot.slane %v3213, %v3226
        %v3228 = vcombine.low %v3035, %v3043
        %v3229 = vcombine.high %v3035, %v3043
        %v3231 = vunpack.c.l.s4 1983009808
        %v3232 = vunpack.c.0.s8 %v3231
        %v3233 = vlaneseq
        %v3234 = vshrl.u32 %v3233, 7
        %v3235 = vsub.s32 %v3232, %v3234
        %v3236 = vrot.slane %v3228, %v3235
        %v3238 = vunpack.c.l.s4 1983009808
        %v3239 = vunpack.c.0.s8 %v3238
        %v3240 = vlaneseq
        %v3241 = vshrl.u32 %v3240, 7
        %v3242 = vsub.s32 %v3239, %v3241
        %v3243 = vrot.slane %v3229, %v3242
        %v3244 = vcombine.low %v3047, %v3055
        %v3245 = vcombine.high %v3047, %v3055
        %v3247 = vunpack.c.l.s4 1983009808
        %v3248 = vunpack.c.0.s8 %v3247
        %v3249 = vlaneseq
        %v3250 = vshrl.u32 %v3249, 7
        %v3251 = vsub.s32 %v3248, %v3250
        %v3252 = vrot.slane %v3244, %v3251
        %v3254 = vunpack.c.l.s4 1983009808
        %v3255 = vunpack.c.0.s8 %v3254
        %v3256 = vlaneseq
        %v3257 = vshrl.u32 %v3256, 7
        %v3258 = vsub.s32 %v3255, %v3257
        %v3259 = vrot.slane %v3245, %v3258
        %v3260 = vcombine.low %v3051, %v3059
        %v3261 = vcombine.high %v3051, %v3059
        %v3263 = vunpack.c.l.s4 1983009808
        %v3264 = vunpack.c.0.s8 %v3263
        %v3265 = vlaneseq
        %v3266 = vshrl.u32 %v3265, 7
        %v3267 = vsub.s32 %v3264, %v3266
        %v3268 = vrot.slane %v3260, %v3267
        %v3270 = vunpack.c.l.s4 1983009808
        %v3271 = vunpack.c.0.s8 %v3270
        %v3272 = vlaneseq
        %v3273 = vshrl.u32 %v3272, 7
        %v3274 = vsub.s32 %v3271, %v3273
        %v3275 = vrot.slane %v3261, %v3274
        %v3276 = vcombine.low %v3220, %v3236
        %v3277 = vcombine.high %v3220, %v3236
        %v3279 = vunpack.c.l.s4 1934713408
        %v3280 = vunpack.c.0.s8 %v3279
        %v3281 = vlaneseq
        %v3282 = vshrl.u32 %v3281, 7
        %v3283 = vsub.s32 %v3280, %v3282
        %v3284 = vrot.slane %v3276, %v3283
        %v3286 = vunpack.c.l.s4 1934713408
        %v3287 = vunpack.c.0.s8 %v3286
        %v3288 = vlaneseq
        %v3289 = vshrl.u32 %v3288, 7
        %v3290 = vsub.s32 %v3287, %v3289
        %v3291 = vrot.slane %v3277, %v3290
        %v3292 = vcombine.low %v3227, %v3243
        %v3293 = vcombine.high %v3227, %v3243
        %v3295 = vunpack.c.l.s4 1934713408
        %v3296 = vunpack.c.0.s8 %v3295
        %v3297 = vlaneseq
        %v3298 = vshrl.u32 %v3297, 7
        %v3299 = vsub.s32 %v3296, %v3298
        %v3300 = vrot.slane %v3292, %v3299
        %v3302 = vunpack.c.l.s4 1934713408
        %v3303 = vunpack.c.0.s8 %v3302
        %v3304 = vlaneseq
        %v3305 = vshrl.u32 %v3304, 7
        %v3306 = vsub.s32 %v3303, %v3305
        %v3307 = vrot.slane %v3293, %v3306
        %v3308 = vcombine.low %v3252, %v3268
        %v3309 = vcombine.high %v3252, %v3268
        %v3311 = vunpack.c.l.s4 1934713408
        %v3312 = vunpack.c.0.s8 %v3311
        %v3313 = vlaneseq
        %v3314 = vshrl.u32 %v3313, 7
        %v3315 = vsub.s32 %v3312, %v3314
        %v3316 = vrot.slane %v3308, %v3315
        %v3318 = vunpack.c.l.s4 1934713408
        %v3319 = vunpack.c.0.s8 %v3318
        %v3320 = vlaneseq
        %v3321 = vshrl.u32 %v3320, 7
        %v3322 = vsub.s32 %v3319, %v3321
        %v3323 = vrot.slane %v3309, %v3322
        %v3324 = vcombine.low %v3259, %v3275
        %v3325 = vcombine.high %v3259, %v3275
        %v3327 = vunpack.c.l.s4 1934713408
        %v3328 = vunpack.c.0.s8 %v3327
        %v3329 = vlaneseq
        %v3330 = vshrl.u32 %v3329, 7
        %v3331 = vsub.s32 %v3328, %v3330
        %v3332 = vrot.slane %v3324, %v3331
        %v3334 = vunpack.c.l.s4 1934713408
        %v3335 = vunpack.c.0.s8 %v3334
        %v3336 = vlaneseq
        %v3337 = vshrl.u32 %v3336, 7
        %v3338 = vsub.s32 %v3335, %v3337
        %v3339 = vrot.slane %v3325, %v3338
        %v3340 = vcombine.low %v3284, %v3316
        %v3341 = vcombine.high %v3284, %v3316
        %v3342 = vcombine.low %v3291, %v3323
        %v3343 = vcombine.high %v3291, %v3323
        %v3344 = vcombine.low %v3300, %v3332
        %v3345 = vcombine.high %v3300, %v3332
        %v3346 = vcombine.low %v3307, %v3339
        %v3347 = vcombine.high %v3307, %v3339
        %3349 = vrot.lane.b32.xlu0 %v3205, 16
        %v3350 = vpop.permute.xlu0 %3349
        %3353 = vrot.lane.b32.xlu0 %v3206, 32
        %v3354 = vpop.permute.xlu0 %3353
        %3357 = vrot.lane.b32.xlu0 %v3207, 48
        %v3358 = vpop.permute.xlu0 %3357
        %3361 = vrot.lane.b32.xlu0 %v3208, 64
        %v3362 = vpop.permute.xlu0 %3361
        %3365 = vrot.lane.b32.xlu0 %v3209, 80
        %v3366 = vpop.permute.xlu0 %3365
        %3369 = vrot.lane.b32.xlu0 %v3210, 96
        %v3370 = vpop.permute.xlu0 %3369
        %3373 = vrot.lane.b32.xlu0 %v3211, 112
        %v3374 = vpop.permute.xlu0 %3373
        %3377 = vrot.lane.b32.xlu0 %v3341, 16
        %v3378 = vpop.permute.xlu0 %3377
        %3381 = vrot.lane.b32.xlu0 %v3342, 32
        %v3382 = vpop.permute.xlu0 %3381
        %3385 = vrot.lane.b32.xlu0 %v3343, 48
        %v3386 = vpop.permute.xlu0 %3385
        %3389 = vrot.lane.b32.xlu0 %v3344, 64
        %v3390 = vpop.permute.xlu0 %3389
        %3393 = vrot.lane.b32.xlu0 %v3345, 80
        %v3394 = vpop.permute.xlu0 %3393
        %3397 = vrot.lane.b32.xlu0 %v3346, 96
        %v3398 = vpop.permute.xlu0 %3397
        %3401 = vrot.lane.b32.xlu0 %v3347, 112
        %v3402 = vpop.permute.xlu0 %3401
        %v3404 = vsel %vm683, %v3204, %v3350
        %v3405 = vsel %vm685, %v3404, %v3354
        %v3406 = vsel %vm687, %v3405, %v3358
        %v3407 = vsel %vm689, %v3406, %v3362
        %v3408 = vsel %vm691, %v3407, %v3366
        %v3409 = vsel %vm693, %v3408, %v3370
        %v3410 = vsel %vm695, %v3409, %v3374
        %v3411 = vsel %vm683, %v3340, %v3378
        %v3412 = vsel %vm685, %v3411, %v3382
        %v3413 = vsel %vm687, %v3412, %v3386
        %v3414 = vsel %vm689, %v3413, %v3390
        %v3415 = vsel %vm691, %v3414, %v3394
        %v3416 = vsel %vm693, %v3415, %v3398
        %v3417 = vsel %vm695, %v3416, %v3402
        %3418 = vrot.lane.b32.xlu0 %v2654, 124
        %v3419 = vpop.permute.xlu0 %3418
        %3420 = vrot.lane.b32.xlu0 %v2655, 124
        %v3421 = vpop.permute.xlu0 %3420
        %3422 = vrot.lane.b32.xlu0 %v2656, 124
        %v3423 = vpop.permute.xlu0 %3422
        %3424 = vrot.lane.b32.xlu0 %v2657, 124
        %v3425 = vpop.permute.xlu0 %3424
        %3426 = vrot.lane.b32.xlu0 %v2658, 124
        %v3427 = vpop.permute.xlu0 %3426
        %3428 = vrot.lane.b32.xlu0 %v2659, 124
        %v3429 = vpop.permute.xlu0 %3428
        %3430 = vrot.lane.b32.xlu0 %v2660, 124
        %v3431 = vpop.permute.xlu0 %3430
        %3432 = vrot.lane.b32.xlu0 %v2661, 124
        %v3433 = vpop.permute.xlu0 %3432
        %3434 = vrot.lane.b32.xlu0 %v2662, 124
        %v3435 = vpop.permute.xlu0 %3434
        %3436 = vrot.lane.b32.xlu0 %v2663, 124
        %v3437 = vpop.permute.xlu0 %3436
        %3438 = vrot.lane.b32.xlu0 %v2664, 124
        %v3439 = vpop.permute.xlu0 %3438
        %3440 = vrot.lane.b32.xlu0 %v2665, 124
        %v3441 = vpop.permute.xlu0 %3440
        %3442 = vrot.lane.b32.xlu0 %v2666, 124
        %v3443 = vpop.permute.xlu0 %3442
        %3444 = vrot.lane.b32.xlu0 %v2667, 124
        %v3445 = vpop.permute.xlu0 %3444
        %3446 = vrot.lane.b32.xlu0 %v2668, 124
        %v3447 = vpop.permute.xlu0 %3446
        %3448 = vrot.lane.b32.xlu0 %v2669, 124
        %v3449 = vpop.permute.xlu0 %3448
        %v3466 = vcombine.low %v3419, %v3427
        %v3467 = vcombine.high %v3419, %v3427
        %v3469 = vunpack.c.l.s4 1983009808
        %v3470 = vunpack.c.0.s8 %v3469
        %v3471 = vlaneseq
        %v3472 = vshrl.u32 %v3471, 7
        %v3473 = vsub.s32 %v3470, %v3472
        %v3474 = vrot.slane %v3466, %v3473
        %v3476 = vunpack.c.l.s4 1983009808
        %v3477 = vunpack.c.0.s8 %v3476
        %v3478 = vlaneseq
        %v3479 = vshrl.u32 %v3478, 7
        %v3480 = vsub.s32 %v3477, %v3479
        %v3481 = vrot.slane %v3467, %v3480
        %v3482 = vcombine.low %v3423, %v3431
        %v3483 = vcombine.high %v3423, %v3431
        %v3485 = vunpack.c.l.s4 1983009808
        %v3486 = vunpack.c.0.s8 %v3485
        %v3487 = vlaneseq
        %v3488 = vshrl.u32 %v3487, 7
        %v3489 = vsub.s32 %v3486, %v3488
        %v3490 = vrot.slane %v3482, %v3489
        %v3492 = vunpack.c.l.s4 1983009808
        %v3493 = vunpack.c.0.s8 %v3492
        %v3494 = vlaneseq
        %v3495 = vshrl.u32 %v3494, 7
        %v3496 = vsub.s32 %v3493, %v3495
        %v3497 = vrot.slane %v3483, %v3496
        %v3498 = vcombine.low %v3435, %v3443
        %v3499 = vcombine.high %v3435, %v3443
        %v3501 = vunpack.c.l.s4 1983009808
        %v3502 = vunpack.c.0.s8 %v3501
        %v3503 = vlaneseq
        %v3504 = vshrl.u32 %v3503, 7
        %v3505 = vsub.s32 %v3502, %v3504
        %v3506 = vrot.slane %v3498, %v3505
        %v3508 = vunpack.c.l.s4 1983009808
        %v3509 = vunpack.c.0.s8 %v3508
        %v3510 = vlaneseq
        %v3511 = vshrl.u32 %v3510, 7
        %v3512 = vsub.s32 %v3509, %v3511
        %v3513 = vrot.slane %v3499, %v3512
        %v3514 = vcombine.low %v3439, %v3447
        %v3515 = vcombine.high %v3439, %v3447
        %v3517 = vunpack.c.l.s4 1983009808
        %v3518 = vunpack.c.0.s8 %v3517
        %v3519 = vlaneseq
        %v3520 = vshrl.u32 %v3519, 7
        %v3521 = vsub.s32 %v3518, %v3520
        %v3522 = vrot.slane %v3514, %v3521
        %v3524 = vunpack.c.l.s4 1983009808
        %v3525 = vunpack.c.0.s8 %v3524
        %v3526 = vlaneseq
        %v3527 = vshrl.u32 %v3526, 7
        %v3528 = vsub.s32 %v3525, %v3527
        %v3529 = vrot.slane %v3515, %v3528
        %v3530 = vcombine.low %v3474, %v3490
        %v3531 = vcombine.high %v3474, %v3490
        %v3533 = vunpack.c.l.s4 1934713408
        %v3534 = vunpack.c.0.s8 %v3533
        %v3535 = vlaneseq
        %v3536 = vshrl.u32 %v3535, 7
        %v3537 = vsub.s32 %v3534, %v3536
        %v3538 = vrot.slane %v3530, %v3537
        %v3540 = vunpack.c.l.s4 1934713408
        %v3541 = vunpack.c.0.s8 %v3540
        %v3542 = vlaneseq
        %v3543 = vshrl.u32 %v3542, 7
        %v3544 = vsub.s32 %v3541, %v3543
        %v3545 = vrot.slane %v3531, %v3544
        %v3546 = vcombine.low %v3481, %v3497
        %v3547 = vcombine.high %v3481, %v3497
        %v3549 = vunpack.c.l.s4 1934713408
        %v3550 = vunpack.c.0.s8 %v3549
        %v3551 = vlaneseq
        %v3552 = vshrl.u32 %v3551, 7
        %v3553 = vsub.s32 %v3550, %v3552
        %v3554 = vrot.slane %v3546, %v3553
        %v3556 = vunpack.c.l.s4 1934713408
        %v3557 = vunpack.c.0.s8 %v3556
        %v3558 = vlaneseq
        %v3559 = vshrl.u32 %v3558, 7
        %v3560 = vsub.s32 %v3557, %v3559
        %v3561 = vrot.slane %v3547, %v3560
        %v3562 = vcombine.low %v3506, %v3522
        %v3563 = vcombine.high %v3506, %v3522
        %v3565 = vunpack.c.l.s4 1934713408
        %v3566 = vunpack.c.0.s8 %v3565
        %v3567 = vlaneseq
        %v3568 = vshrl.u32 %v3567, 7
        %v3569 = vsub.s32 %v3566, %v3568
        %v3570 = vrot.slane %v3562, %v3569
        %v3572 = vunpack.c.l.s4 1934713408
        %v3573 = vunpack.c.0.s8 %v3572
        %v3574 = vlaneseq
        %v3575 = vshrl.u32 %v3574, 7
        %v3576 = vsub.s32 %v3573, %v3575
        %v3577 = vrot.slane %v3563, %v3576
        %v3578 = vcombine.low %v3513, %v3529
        %v3579 = vcombine.high %v3513, %v3529
        %v3581 = vunpack.c.l.s4 1934713408
        %v3582 = vunpack.c.0.s8 %v3581
        %v3583 = vlaneseq
        %v3584 = vshrl.u32 %v3583, 7
        %v3585 = vsub.s32 %v3582, %v3584
        %v3586 = vrot.slane %v3578, %v3585
        %v3588 = vunpack.c.l.s4 1934713408
        %v3589 = vunpack.c.0.s8 %v3588
        %v3590 = vlaneseq
        %v3591 = vshrl.u32 %v3590, 7
        %v3592 = vsub.s32 %v3589, %v3591
        %v3593 = vrot.slane %v3579, %v3592
        %v3594 = vcombine.low %v3538, %v3570
        %v3595 = vcombine.high %v3538, %v3570
        %v3596 = vcombine.low %v3545, %v3577
        %v3597 = vcombine.high %v3545, %v3577
        %v3598 = vcombine.low %v3554, %v3586
        %v3599 = vcombine.high %v3554, %v3586
        %v3600 = vcombine.low %v3561, %v3593
        %v3601 = vcombine.high %v3561, %v3593
        %v3602 = vcombine.low %v3421, %v3429
        %v3603 = vcombine.high %v3421, %v3429
        %v3605 = vunpack.c.l.s4 1983009808
        %v3606 = vunpack.c.0.s8 %v3605
        %v3607 = vlaneseq
        %v3608 = vshrl.u32 %v3607, 7
        %v3609 = vsub.s32 %v3606, %v3608
        %v3610 = vrot.slane %v3602, %v3609
        %v3612 = vunpack.c.l.s4 1983009808
        %v3613 = vunpack.c.0.s8 %v3612
        %v3614 = vlaneseq
        %v3615 = vshrl.u32 %v3614, 7
        %v3616 = vsub.s32 %v3613, %v3615
        %v3617 = vrot.slane %v3603, %v3616
        %v3618 = vcombine.low %v3425, %v3433
        %v3619 = vcombine.high %v3425, %v3433
        %v3621 = vunpack.c.l.s4 1983009808
        %v3622 = vunpack.c.0.s8 %v3621
        %v3623 = vlaneseq
        %v3624 = vshrl.u32 %v3623, 7
        %v3625 = vsub.s32 %v3622, %v3624
        %v3626 = vrot.slane %v3618, %v3625
        %v3628 = vunpack.c.l.s4 1983009808
        %v3629 = vunpack.c.0.s8 %v3628
        %v3630 = vlaneseq
        %v3631 = vshrl.u32 %v3630, 7
        %v3632 = vsub.s32 %v3629, %v3631
        %v3633 = vrot.slane %v3619, %v3632
        %v3634 = vcombine.low %v3437, %v3445
        %v3635 = vcombine.high %v3437, %v3445
        %v3637 = vunpack.c.l.s4 1983009808
        %v3638 = vunpack.c.0.s8 %v3637
        %v3639 = vlaneseq
        %v3640 = vshrl.u32 %v3639, 7
        %v3641 = vsub.s32 %v3638, %v3640
        %v3642 = vrot.slane %v3634, %v3641
        %v3644 = vunpack.c.l.s4 1983009808
        %v3645 = vunpack.c.0.s8 %v3644
        %v3646 = vlaneseq
        %v3647 = vshrl.u32 %v3646, 7
        %v3648 = vsub.s32 %v3645, %v3647
        %v3649 = vrot.slane %v3635, %v3648
        %v3650 = vcombine.low %v3441, %v3449
        %v3651 = vcombine.high %v3441, %v3449
        %v3653 = vunpack.c.l.s4 1983009808
        %v3654 = vunpack.c.0.s8 %v3653
        %v3655 = vlaneseq
        %v3656 = vshrl.u32 %v3655, 7
        %v3657 = vsub.s32 %v3654, %v3656
        %v3658 = vrot.slane %v3650, %v3657
        %v3660 = vunpack.c.l.s4 1983009808
        %v3661 = vunpack.c.0.s8 %v3660
        %v3662 = vlaneseq
        %v3663 = vshrl.u32 %v3662, 7
        %v3664 = vsub.s32 %v3661, %v3663
        %v3665 = vrot.slane %v3651, %v3664
        %v3666 = vcombine.low %v3610, %v3626
        %v3667 = vcombine.high %v3610, %v3626
        %v3669 = vunpack.c.l.s4 1934713408
        %v3670 = vunpack.c.0.s8 %v3669
        %v3671 = vlaneseq
        %v3672 = vshrl.u32 %v3671, 7
        %v3673 = vsub.s32 %v3670, %v3672
        %v3674 = vrot.slane %v3666, %v3673
        %v3676 = vunpack.c.l.s4 1934713408
        %v3677 = vunpack.c.0.s8 %v3676
        %v3678 = vlaneseq
        %v3679 = vshrl.u32 %v3678, 7
        %v3680 = vsub.s32 %v3677, %v3679
        %v3681 = vrot.slane %v3667, %v3680
        %v3682 = vcombine.low %v3617, %v3633
        %v3683 = vcombine.high %v3617, %v3633
        %v3685 = vunpack.c.l.s4 1934713408
        %v3686 = vunpack.c.0.s8 %v3685
        %v3687 = vlaneseq
        %v3688 = vshrl.u32 %v3687, 7
        %v3689 = vsub.s32 %v3686, %v3688
        %v3690 = vrot.slane %v3682, %v3689
        %v3692 = vunpack.c.l.s4 1934713408
        %v3693 = vunpack.c.0.s8 %v3692
        %v3694 = vlaneseq
        %v3695 = vshrl.u32 %v3694, 7
        %v3696 = vsub.s32 %v3693, %v3695
        %v3697 = vrot.slane %v3683, %v3696
        %v3698 = vcombine.low %v3642, %v3658
        %v3699 = vcombine.high %v3642, %v3658
        %v3701 = vunpack.c.l.s4 1934713408
        %v3702 = vunpack.c.0.s8 %v3701
        %v3703 = vlaneseq
        %v3704 = vshrl.u32 %v3703, 7
        %v3705 = vsub.s32 %v3702, %v3704
        %v3706 = vrot.slane %v3698, %v3705
        %v3708 = vunpack.c.l.s4 1934713408
        %v3709 = vunpack.c.0.s8 %v3708
        %v3710 = vlaneseq
        %v3711 = vshrl.u32 %v3710, 7
        %v3712 = vsub.s32 %v3709, %v3711
        %v3713 = vrot.slane %v3699, %v3712
        %v3714 = vcombine.low %v3649, %v3665
        %v3715 = vcombine.high %v3649, %v3665
        %v3717 = vunpack.c.l.s4 1934713408
        %v3718 = vunpack.c.0.s8 %v3717
        %v3719 = vlaneseq
        %v3720 = vshrl.u32 %v3719, 7
        %v3721 = vsub.s32 %v3718, %v3720
        %v3722 = vrot.slane %v3714, %v3721
        %v3724 = vunpack.c.l.s4 1934713408
        %v3725 = vunpack.c.0.s8 %v3724
        %v3726 = vlaneseq
        %v3727 = vshrl.u32 %v3726, 7
        %v3728 = vsub.s32 %v3725, %v3727
        %v3729 = vrot.slane %v3715, %v3728
        %v3730 = vcombine.low %v3674, %v3706
        %v3731 = vcombine.high %v3674, %v3706
        %v3732 = vcombine.low %v3681, %v3713
        %v3733 = vcombine.high %v3681, %v3713
        %v3734 = vcombine.low %v3690, %v3722
        %v3735 = vcombine.high %v3690, %v3722
        %v3736 = vcombine.low %v3697, %v3729
        %v3737 = vcombine.high %v3697, %v3729
        %3739 = vrot.lane.b32.xlu0 %v3595, 16
        %v3740 = vpop.permute.xlu0 %3739
        %3743 = vrot.lane.b32.xlu0 %v3596, 32
        %v3744 = vpop.permute.xlu0 %3743
        %3747 = vrot.lane.b32.xlu0 %v3597, 48
        %v3748 = vpop.permute.xlu0 %3747
        %3751 = vrot.lane.b32.xlu0 %v3598, 64
        %v3752 = vpop.permute.xlu0 %3751
        %3755 = vrot.lane.b32.xlu0 %v3599, 80
        %v3756 = vpop.permute.xlu0 %3755
        %3759 = vrot.lane.b32.xlu0 %v3600, 96
        %v3760 = vpop.permute.xlu0 %3759
        %3763 = vrot.lane.b32.xlu0 %v3601, 112
        %v3764 = vpop.permute.xlu0 %3763
        %3767 = vrot.lane.b32.xlu0 %v3731, 16
        %v3768 = vpop.permute.xlu0 %3767
        %3771 = vrot.lane.b32.xlu0 %v3732, 32
        %v3772 = vpop.permute.xlu0 %3771
        %3775 = vrot.lane.b32.xlu0 %v3733, 48
        %v3776 = vpop.permute.xlu0 %3775
        %3779 = vrot.lane.b32.xlu0 %v3734, 64
        %v3780 = vpop.permute.xlu0 %3779
        %3783 = vrot.lane.b32.xlu0 %v3735, 80
        %v3784 = vpop.permute.xlu0 %3783
        %3787 = vrot.lane.b32.xlu0 %v3736, 96
        %v3788 = vpop.permute.xlu0 %3787
        %3791 = vrot.lane.b32.xlu0 %v3737, 112
        %v3792 = vpop.permute.xlu0 %3791
        %v3794 = vsel %vm683, %v3594, %v3740
        %v3795 = vsel %vm685, %v3794, %v3744
        %v3796 = vsel %vm687, %v3795, %v3748
        %v3797 = vsel %vm689, %v3796, %v3752
        %v3798 = vsel %vm691, %v3797, %v3756
        %v3799 = vsel %vm693, %v3798, %v3760
        %v3800 = vsel %vm695, %v3799, %v3764
        %v3801 = vsel %vm683, %v3730, %v3768
        %v3802 = vsel %vm685, %v3801, %v3772
        %v3803 = vsel %vm687, %v3802, %v3776
        %v3804 = vsel %vm689, %v3803, %v3780
        %v3805 = vsel %vm691, %v3804, %v3784
        %v3806 = vsel %vm693, %v3805, %v3788
        %v3807 = vsel %vm695, %v3806, %v3792
        %v3808 = vld [vmem:[%s1] sm:$0xff]
        %v3809 = vld [vmem:[%s1 + $0x8] sm:$0xff]
        %vm3810 = vcmask 588800
        %v3812 = vsel %vm3810, %v3808, 0
        %v3815 = vsel %vm3810, %v3809, 0
        %3817 = vmatprep.subr.mxu0 %v703
        %3818 = vmatpush1.msra.mxu0 %v696
        %3819 = vmatprep.subr.mxu0 %v1109
        %3820 = vmatpush1.msra.mxu0 %v1102
        %3821 = vmatprep.subr.mxu0 %v1499
        %3822 = vmatpush1.msra.mxu0 %v1492
        %3823 = vmatprep.subr.mxu0 %v1857
        %3824 = vmatpush1.msra.mxu0 %v1850
        %3825 = vmatprep.subr.mxu0 %v2263
        %3826 = vmatpush1.msra.mxu0 %v2256
        %3827 = vmatprep.subr.mxu0 %v2653
        %3828 = vmatpush1.msra.mxu0 %v2646
        %3829 = vmatprep.subr.mxu0 %v3011
        %3830 = vmatpush1.msra.mxu0 %v3004
        %3831 = vmatprep.subr.mxu0 %v3417
        %3832 = vmatpush1.msra.mxu0 %v3410
        %3833 = vmatprep.subr.mxu0 %v3807
        %3834 = vmatpush1.msra.mxu0 %v3800
        %3835 = vmatprep.subr.mxu0 0.0
        %3836 = vmatpush1.msra.mxu0 0.0
        %3837 = vmatprep.subr.mxu0 0.0
        %3838 = vmatpush1.msra.mxu0 0.0
        %3839 = vmatprep.subr.mxu0 0.0
        %3840 = vmatpush1.msra.mxu0 0.0
        %3841 = vmatprep.subr.mxu0 0.0
        %3842 = vmatpush1.msra.mxu0 0.0
        %3843 = vmatprep.subr.mxu0 0.0
        %3844 = vmatpush1.msra.mxu0 0.0
        %3845 = vmatprep.subr.mxu0 0.0
        %3846 = vmatpush1.msra.mxu0 0.0
        %3847 = vmatprep.subr.mxu0 0.0
        %3848 = vmatpush1.msra.mxu0 0.0
        %3849 = vmatprep.subr.mxu0 0.0
        %3850 = vmatpush1.msra.mxu0 0.0
        %3851 = vmatprep.subr.mxu0 0.0
        %3852 = vmatpush1.msra.mxu0 0.0
        %3853 = vmatprep.subr.mxu0 0.0
        %3854 = vmatpush1.msra.mxu0 0.0
        %3855 = vmatprep.subr.mxu0 0.0
        %3856 = vmatpush1.msra.mxu0 0.0
        %3857 = vmatprep.subr.mxu0 0.0
        %3858 = vmatpush1.msra.mxu0 0.0
        %3859 = vmatprep.subr.mxu0 0.0
        %3860 = vmatpush1.msra.mxu0 0.0
        %3861 = vmatprep.subr.mxu0 0.0
        %3862 = vmatpush1.msra.mxu0 0.0
        %3863 = vmatprep.subr.mxu0 0.0
        %3864 = vmatpush1.msra.mxu0 0.0
        %3865 = vmatprep.subr.mxu0 0.0
        %3866 = vmatpush1.msra.mxu0 0.0
        %3867 = vmatprep.subr.mxu0 0.0
        %3868 = vmatpush1.msra.mxu0 0.0
        %3869 = vmatprep.subr.mxu0 0.0
        %3870 = vmatpush1.msra.mxu0 0.0
        %3871 = vmatprep.subr.mxu0 0.0
        %3872 = vmatpush1.msra.mxu0 0.0
        %3873 = vmatprep.subr.mxu0 0.0
        %3874 = vmatpush1.msra.mxu0 0.0
        %3875 = vmatprep.subr.mxu0 0.0
        %3876 = vmatpush1.msra.mxu0 0.0
        %3877 = vmatprep.subr.mxu0 0.0
        %3878 = vmatpush1.msra.mxu0 0.0
        %3879 = vmatprep.subr.mxu0 0.0
        %3880 = vmatpush1.msra.mxu0 0.0
        %3881 = vmatprep.mubr.f32.mxu0 0.0
        %3882 = vmatmul.mubr.f32.gmra.mrb[0].mxu0 %v3812
        %v3883 = vpop.f32.mrb[0].mxu0
        %v3884 = vadd.f32 0.0, %v3883
        %v3885 = vpop.f32.mrb[0].mxu0
        %v3886 = vadd.f32 0.0, %v3885
        %3887 = vmatprep.mubr.f32.mxu0 0.0
        %3888 = vmatmul.mubr.f32.gmra.mrb[0].mxu0 %v3815
        %v3889 = vpop.f32.mrb[0].mxu0
        %v3890 = vadd.f32 0.0, %v3889
        %v3891 = vpop.f32.mrb[0].mxu0
        %v3892 = vadd.f32 0.0, %v3891
        %3893 = vdwg.mxu0
        %v3894 = vld [vmem:[%s2] sm:$0xff]
        %v3895 = vld [vmem:[%s2 + $0x8] sm:$0xff]
        %3897 = vset.pattern.permute.xlu0 0
        %3898 = vperm.xlu0 %3897, %v3894
        %v3899 = vpop.permute.xlu0 %3898
        %3902 = vset.pattern.permute.xlu0 0
        %3903 = vperm.xlu0 %3902, %v3895
        %v3904 = vpop.permute.xlu0 %3903
        %v3906 = vmul.f32 %v3884, %v3899
        %v3907 = vmul.f32 %v3886, %v3899
        %v3908 = vmul.f32 %v3890, %v3904
        %v3909 = vmul.f32 %v3892, %v3904
        %v3910 = vld [vmem:[%s3] sm:$0xff]
        %v3911 = vld [vmem:[%s3 + $0x8] sm:$0xff]
        %3913 = vset.pattern.permute.xlu0 0
        %3914 = vperm.xlu0 %3913, %v3910
        %v3915 = vpop.permute.xlu0 %3914
        %3918 = vset.pattern.permute.xlu0 0
        %3919 = vperm.xlu0 %3918, %v3911
        %v3920 = vpop.permute.xlu0 %3919
        %v3922 = vadd.f32 %v3906, %v3915
        %v3923 = vadd.f32 %v3907, %v3915
        %v3924 = vadd.f32 %v3908, %v3920
        %v3925 = vadd.f32 %v3909, %v3920
        %v3926 = vmax.f32 %v3922, 0.0
        %v3927 = vmax.f32 %v3923, 0.0
        %v3928 = vmax.f32 %v3924, 0.0
        %v3929 = vmax.f32 %v3925, 0.0
        %3930 = vst [vmem:[%s215] sm:$0xff] %v3926
        %3931 = vst [vmem:[%s215 + $0x8] sm:$0xff] %v3927
        %3932 = vst [vmem:[%s215 + $0x10] sm:$0xff] %v3928
        %3933 = vst [vmem:[%s215 + $0x18] sm:$0xff] %v3929
        %s3934 = sand.u32 %s118, 1
        %s3935 = scalar_lea.sflag [#allocation5], %s3934
        %s3936 = sand.u32 %s118, 1
        %s3937 = smul.addr %s3936, 32
        %s3938 = scalar_lea.vmem [#allocation6], %s3937
        // Predicated region
        $region41: #{tpu_custom_call.1} parent=35 // pred_check
          %p3939 = pneg %p128
        $region42: #{tpu_custom_call.1} parent=35 // pred_check_branch
          %3941 = sbr.rel (%p3939) target = $region44
        $region43: #{tpu_custom_call.1} parent=35 // pred_region
          %s3943 = ssub.s32 512, 512
          %3944 = vsyncadd %s3935, %s3943
          %s3945 = smul.addr %s21, 4
          %s3946 = smul.addr %s3945, 128
          %s3947 = scalar_lea.hbm %s4, %s3946
          %s3948 = sshll.u32 %s3938, 4
          %s3949 = int_to_ptr.vmem [resolvable:$true] %s3948
          %3954 = dma.vmem_to_hbm [thread:$0]  %s3949, 512, %s3947, %s3935, 256, 256, 16
        $region44: #{tpu_custom_call.1} parent=35 // pred_fallthru
          _
      $region36: #{tpu_custom_call.1} parent=5 // pred_fallthru
        _
      %p3955 = scmp.le.s32.totalorder 2, %s16
      // Predicated region
      $region45: #{tpu_custom_call.1} parent=5 // pred_check
        %p3956 = pneg %p3955
      $region46: #{tpu_custom_call.1} parent=5 // pred_check_branch
        %3958 = sbr.rel (%p3956) target = $region48
      $region47: #{tpu_custom_call.1} parent=5 // pred_region
        %s3959 = ssub.s32 %s16, 2
        // Predicated region
        $region49: #{tpu_custom_call.1} parent=47 // pred_check
          %p3960 = pneg %p134
        $region50: #{tpu_custom_call.1} parent=47 // pred_check_branch
          %3962 = sbr.rel (%p3960) target = $region52
        $region51: #{tpu_custom_call.1} parent=47 // pred_region
          %s3963 = sand.u32 %s119, 1
          %s3964 = scalar_lea.sflag [#allocation5], %s3963
          %s3965 = sand.u32 %s119, 1
          %s3966 = smul.addr %s3965, 32
          %s3967 = scalar_lea.vmem [#allocation6], %s3966
          %3968 = dma.done %s3964, 512
        $region52: #{tpu_custom_call.1} parent=47 // pred_fallthru
          _
      $region48: #{tpu_custom_call.1} parent=5 // pred_fallthru
        _
    $region6: #{tpu_custom_call.1} parent=1 // loop_footer
      %s20 = sadd.s32 1, %s16
    $region7: #{tpu_custom_call.1} parent=1 // loop_footer_branch
      %15 = sbr.rel target = $region3
    $region8: #{tpu_custom_call.1} parent=1 // loop_exit
      _
    %3969 = vsyncpa [#allocation4], 1
    %s3970 = scalar_lea.sflag [#allocation4], 1
    %3971 = vsyncpa %s3970, 1
    %3972 = vsyncpa [#allocation5], 1
    %s3973 = scalar_lea.sflag [#allocation5], 1
    %3974 = vsyncpa %s3973, 1

</llo_original>
